<compile_context>
chip_gen: v5e
topology: v5e:2x2
jax: 0.10.0
libtpu: 0.0.40
codegen_flags: <defaults>
</compile_context>

<pallas_src>
import functools

import jax
import jax.numpy as jnp
from jax import lax
from jax.experimental import pallas as pl
from jax.experimental.pallas import tpu as pltpu

G2 = 2.0  # diffusion(t)^2 = 2 for the default OU process


# ---------------------------------------------------------------------------
# Single fused kernel: whole Euler time loop, state carried as a loop value.
#   coef_ref  : SMEM (3*(n_steps-1),)        [a, b, c] per step
#   xinit_ref : VMEM (R, P)  R=B*C, P=H*W    initial state
#   w_ref     : VMEM (R, 9*R)                fused block-diag conv weights
#   bias_ref  : VMEM (R, 1)                  conv bias (per b,c_out row)
#   mask_ref  : VMEM (9, 1, P)               zero-padding border mask per tap
#   noise_ref : VMEM (n_steps-1, R, P)       all Gaussian increments (resident)
#   o_ref     : VMEM (R, P)                  final state
# ---------------------------------------------------------------------------
def _sde_fused_kernel(coef_ref, xinit_ref, w_ref, bias_ref, mask_ref, noise_ref,
                      o_ref, *, img_w, n_steps_m1):
    x0 = xinit_ref[...]                      # (R, P), full sublanes, lane-dense
    _, P = x0.shape
    w = w_ref[...]                           # (R, 9R) -- hoisted out of the loop
    bias = bias_ref[...]                     # (R, 1)
    masks = mask_ref[...]                    # (9, 1, P)

    def step(s, x):
        # 3x3 conv on the resident state: 9 shifted taps (XLU roll + border mask)
        # stacked into one (9R, P) slab and contracted in a single MXU dot.
        taps = []
        for tap in range(9):
            dy, dx = tap // 3, tap % 3
            shift = (dy - 1) * img_w + (dx - 1)  # flattened in-image pixel offset
            if shift == 0:
                taps.append(x)                   # center tap: mask is all-ones
            else:
                taps.append(pltpu.roll(x, shift=(-shift) % P, axis=1) * masks[tap])
        patches = jnp.concatenate(taps, axis=0)                       # (9R, P)
        conv = jnp.dot(w, patches, preferred_element_type=jnp.float32) + bias

        # x_{k+1} = a*x + b*conv + c*noise   (score/drift algebra folded into a,b,c)
        a = coef_ref[3 * s]
        b = coef_ref[3 * s + 1]
        c = coef_ref[3 * s + 2]
        return a * x + b * conv + c * noise_ref[s]

    o_ref[...] = lax.fori_loop(0, n_steps_m1, step, x0, unroll=True)


# ---------------------------------------------------------------------------
# Wrapper: layout conversion, fused block-diag weights, static border masks,
# folded per-step coefficients.
# ---------------------------------------------------------------------------
def diffusion_sde_forward(x_init_nchw, timesteps, w, b, noise_key):
    """DiffusionSDE.forward: sample the backward SDE with Euler from x_init over `timesteps`."""
    B, C, H, W = x_init_nchw.shape
    R = B * C                 # sublane rows (<= 8 here -> full vregs)
    P = H * W                 # lane-dense flattened pixels (multiple of 128)
    n_steps = timesteps.shape[0]

    # state layout: (b,c) rows on sublanes, per-image pixels on lanes
    x_rp = x_init_nchw.reshape(R, P).astype(jnp.float32)

    # pre-drawn Gaussian increments (same draw order as the reference)
    noises = jax.random.normal(noise_key, (n_steps - 1, B, H, W, C), jnp.float32)
    noise_rp = jnp.transpose(noises, (0, 1, 4, 2, 3)).reshape(n_steps - 1, R, P)

    # conv weight (9C, C) [tap*C + c_in, c_out]  ->  fused block-diag-over-batch
    # (R, 9R) matrix so the 9 taps contract in ONE MXU dot.
    w_taps = w.astype(jnp.float32).reshape(9, C, C)          # [tap, c_in, c_out]
    w_oc = jnp.transpose(w_taps, (0, 2, 1))                  # [tap, c_out, c_in]
    eye_b = jnp.eye(B, dtype=jnp.float32)
    w_big = jnp.einsum('toi,bd->botdi', w_oc, eye_b).reshape(R, 9 * R)
    bias_col = jnp.tile(b.astype(jnp.float32).reshape(1, C), (B, 1)).reshape(R, 1)

    # zero-padding border masks for the 9 taps (static, per-image: no batch wrap)
    p_idx = jnp.arange(P, dtype=jnp.int32)
    hh = p_idx // W
    ww = p_idx % W
    masks = []
    for dy in range(3):
        for dx in range(3):
            valid = ((hh + (dy - 1) >= 0) & (hh + (dy - 1) < H)
                     & (ww + (dx - 1) >= 0) & (ww + (dx - 1) < W))
            masks.append(valid)
    mask = jnp.stack(masks).astype(jnp.float32).reshape(9, 1, P)

    # fold per-step scalar algebra:  x_new = a*x + b*conv + c*noise
    #   a = 1 + dt + 2*dt*(exp(-t)-1)/sigma^2
    #   b = -2*dt*exp(-t)*sigma/sigma^2
    #   c = sqrt(2*dt)
    t0 = timesteps[:-1].astype(jnp.float32)
    t1 = timesteps[1:].astype(jnp.float32)
    dt = jnp.abs(t1 - t0)
    exp_mt = jnp.exp(-t0)
    sigma2 = jnp.maximum(1.0 - jnp.exp(-2.0 * t0), 1e-12)   # guard the hidden divide
    sigma = jnp.sqrt(sigma2)
    a_c = 1.0 + dt + G2 * dt * (exp_mt - 1.0) / sigma2
    b_c = -G2 * dt * exp_mt * sigma / sigma2
    c_c = jnp.sqrt(G2 * dt)
    coefs = jnp.stack([a_c, b_c, c_c], axis=1).reshape(-1).astype(jnp.float32)

    out_rp = pl.pallas_call(
        functools.partial(_sde_fused_kernel, img_w=W, n_steps_m1=n_steps - 1),
        out_shape=jax.ShapeDtypeStruct((R, P), jnp.float32),
        in_specs=[
            pl.BlockSpec(memory_space=pltpu.MemorySpace.SMEM),   # coef table
            pl.BlockSpec(memory_space=pltpu.MemorySpace.VMEM),   # x_init
            pl.BlockSpec(memory_space=pltpu.MemorySpace.VMEM),   # fused conv weight
            pl.BlockSpec(memory_space=pltpu.MemorySpace.VMEM),   # conv bias
            pl.BlockSpec(memory_space=pltpu.MemorySpace.VMEM),   # border masks
            pl.BlockSpec(memory_space=pltpu.MemorySpace.VMEM),   # all-step noise (64 KiB)
        ],
        out_specs=pl.BlockSpec(memory_space=pltpu.MemorySpace.VMEM),
    )(coefs, x_rp, w_big, bias_col, mask, noise_rp)

    return out_rp.reshape(B, C, H, W)   # (b,c)-major rows reshape straight to NCHW


# ---------------------------------------------------------------------------
# Pure-JAX reference (unfolded math, im2col conv) for the correctness check.
# ---------------------------------------------------------------------------
def _im2col_3x3(x_nhwc):
    B, H, W, C = x_nhwc.shape
    xp = jnp.pad(x_nhwc, ((0, 0), (1, 1), (1, 1), (0, 0)))
    cols = [xp[:, dy:dy + H, dx:dx + W, :] for dy in range(3) for dx in range(3)]
    return jnp.concatenate(cols, axis=-1).reshape(B * H * W, 9 * C)


def _reference_forward(x_init_nchw, timesteps, w, b, noise_key):
    B, C, H, W = x_init_nchw.shape
    x = jnp.transpose(x_init_nchw, (0, 2, 3, 1)).astype(jnp.float32)  # NHWC
    n_steps = timesteps.shape[0]
    noises = jax.random.normal(noise_key, (n_steps - 1, B, H, W, C), jnp.float32)

    def body(i, x_cur):
        t0, t1 = timesteps[i], timesteps[i + 1]
        dt = jnp.abs(t1 - t0)
        sigma2 = 1.0 - jnp.exp(-2.0 * t0)
        sigma = jnp.sqrt(sigma2)
        exp_mt = jnp.exp(-t0)
        conv = (_im2col_3x3(x_cur) @ w + b).reshape(B, H, W, C)
        denoised = x_cur - sigma * conv
        score = (exp_mt * denoised - x_cur) / sigma2
        drift = x_cur + G2 * score
        return x_cur + drift * dt + jnp.sqrt(G2 * dt) * noises[i]

    x = jax.lax.fori_loop(0, n_steps - 1, body, x)
    return jnp.transpose(x, (0, 3, 1, 2))


if __name__ == "__main__":
    B, C, H, W = 2, 4, 16, 16
    key = jax.random.PRNGKey(0)
    k_prior, k_w, k_b, k_noise = jax.random.split(key, 4)

    # prior_sample: x_T ~ N(0, sigma_t(1)^2 Id)
    sigma_T = jnp.sqrt(1.0 - jnp.exp(-2.0 * 1.0))
    x_init = jax.random.normal(k_prior, (B, C, H, W), jnp.float32) * sigma_T

    # deterministic synthetic denoiser parameters: 3x3 conv, C->C, as (9*C, C) matrix + bias
    w = (jax.random.normal(k_w, (9 * C, C), jnp.float32) * 0.05).astype(jnp.float32)
    b = (jax.random.normal(k_b, (1, C), jnp.float32) * 0.01).astype(jnp.float32)

    # reverse-time schedule (stay away from t=0 where sigma_t -> 0)
    timesteps = jnp.linspace(1.0, 0.05, 9).astype(jnp.float32)

    out = jax.jit(diffusion_sde_forward)(x_init, timesteps, w, b, k_noise)
    out = jax.block_until_ready(out)

    ref = jax.jit(_reference_forward)(x_init, timesteps, w, b, k_noise)
    ref = jax.block_until_ready(ref)

    assert out.shape == (B, C, H, W) and out.dtype == jnp.float32
    assert jnp.allclose(out, ref, rtol=1e-2, atol=1e-2), "Pallas result mismatch"
    print("KERNEL_OK")
</pallas_src>

<mosaic_0001>
module attributes {stable_mosaic.version = 11 : i64} {
  func.func @_sde_fused_kernel(%arg0: memref<24xf32, #tpu.memory_space<smem>>, %arg1: memref<8x256xf32, #tpu.memory_space<vmem>>, %arg2: memref<8x72xf32, #tpu.memory_space<vmem>>, %arg3: memref<8x1xf32, #tpu.memory_space<vmem>>, %arg4: memref<9x1x256xf32, #tpu.memory_space<vmem>>, %arg5: memref<8x8x256xf32, #tpu.memory_space<vmem>>, %arg6: memref<8x256xf32, #tpu.memory_space<vmem>>) attributes {dimension_semantics = [], scalar_prefetch = 0 : i64, scratch_operands = 0 : i64, tpu.core_type = #tpu.core_type<tc>} {
    %c0 = arith.constant 0 : index
    %c0_0 = arith.constant 0 : index
    %0 = vector.load %arg1[%c0, %c0_0] : memref<8x256xf32, #tpu.memory_space<vmem>>, vector<8x256xf32>
    %c0_1 = arith.constant 0 : index
    %c0_2 = arith.constant 0 : index
    %1 = vector.load %arg2[%c0_1, %c0_2] : memref<8x72xf32, #tpu.memory_space<vmem>>, vector<8x72xf32>
    %c0_3 = arith.constant 0 : index
    %c0_4 = arith.constant 0 : index
    %2 = vector.load %arg3[%c0_3, %c0_4] : memref<8x1xf32, #tpu.memory_space<vmem>>, vector<8x1xf32>
    %c0_5 = arith.constant 0 : index
    %c0_6 = arith.constant 0 : index
    %c0_7 = arith.constant 0 : index
    %3 = vector.load %arg4[%c0_5, %c0_6, %c0_7] : memref<9x1x256xf32, #tpu.memory_space<vmem>>, vector<9x1x256xf32>
    %c0_i32 = arith.constant 0 : i32
    %c17_i32 = arith.constant 17 : i32
    %4 = tpu.dynamic_rotate %0 by %c17_i32 dim 1 : vector<8x256xf32>, i32 -> vector<8x256xf32>
    %5 = vector.extract_strided_slice %3 {offsets = [0, 0, 0], sizes = [1, 1, 256], strides = [1, 1, 1]} : vector<9x1x256xf32> to vector<1x1x256xf32>
    %6 = vector.shape_cast %5 : vector<1x1x256xf32> to vector<1x256xf32>
    %7 = vector.broadcast %6 : vector<1x256xf32> to vector<8x256xf32>
    %8 = arith.mulf %4, %7 : vector<8x256xf32>
    %c16_i32 = arith.constant 16 : i32
    %9 = tpu.dynamic_rotate %0 by %c16_i32 dim 1 : vector<8x256xf32>, i32 -> vector<8x256xf32>
    %10 = vector.extract_strided_slice %3 {offsets = [1, 0, 0], sizes = [1, 1, 256], strides = [1, 1, 1]} : vector<9x1x256xf32> to vector<1x1x256xf32>
    %11 = vector.shape_cast %10 : vector<1x1x256xf32> to vector<1x256xf32>
    %12 = vector.broadcast %11 : vector<1x256xf32> to vector<8x256xf32>
    %13 = arith.mulf %9, %12 : vector<8x256xf32>
    %c15_i32 = arith.constant 15 : i32
    %14 = tpu.dynamic_rotate %0 by %c15_i32 dim 1 : vector<8x256xf32>, i32 -> vector<8x256xf32>
    %15 = vector.extract_strided_slice %3 {offsets = [2, 0, 0], sizes = [1, 1, 256], strides = [1, 1, 1]} : vector<9x1x256xf32> to vector<1x1x256xf32>
    %16 = vector.shape_cast %15 : vector<1x1x256xf32> to vector<1x256xf32>
    %17 = vector.broadcast %16 : vector<1x256xf32> to vector<8x256xf32>
    %18 = arith.mulf %14, %17 : vector<8x256xf32>
    %c1_i32 = arith.constant 1 : i32
    %19 = tpu.dynamic_rotate %0 by %c1_i32 dim 1 : vector<8x256xf32>, i32 -> vector<8x256xf32>
    %20 = vector.extract_strided_slice %3 {offsets = [3, 0, 0], sizes = [1, 1, 256], strides = [1, 1, 1]} : vector<9x1x256xf32> to vector<1x1x256xf32>
    %21 = vector.shape_cast %20 : vector<1x1x256xf32> to vector<1x256xf32>
    %22 = vector.broadcast %21 : vector<1x256xf32> to vector<8x256xf32>
    %23 = arith.mulf %19, %22 : vector<8x256xf32>
    %c255_i32 = arith.constant 255 : i32
    %24 = tpu.dynamic_rotate %0 by %c255_i32 dim 1 : vector<8x256xf32>, i32 -> vector<8x256xf32>
    %25 = vector.extract_strided_slice %3 {offsets = [5, 0, 0], sizes = [1, 1, 256], strides = [1, 1, 1]} : vector<9x1x256xf32> to vector<1x1x256xf32>
    %26 = vector.shape_cast %25 : vector<1x1x256xf32> to vector<1x256xf32>
    %27 = vector.broadcast %26 : vector<1x256xf32> to vector<8x256xf32>
    %28 = arith.mulf %24, %27 : vector<8x256xf32>
    %c241_i32 = arith.constant 241 : i32
    %29 = tpu.dynamic_rotate %0 by %c241_i32 dim 1 : vector<8x256xf32>, i32 -> vector<8x256xf32>
    %30 = vector.extract_strided_slice %3 {offsets = [6, 0, 0], sizes = [1, 1, 256], strides = [1, 1, 1]} : vector<9x1x256xf32> to vector<1x1x256xf32>
    %31 = vector.shape_cast %30 : vector<1x1x256xf32> to vector<1x256xf32>
    %32 = vector.broadcast %31 : vector<1x256xf32> to vector<8x256xf32>
    %33 = arith.mulf %29, %32 : vector<8x256xf32>
    %c240_i32 = arith.constant 240 : i32
    %34 = tpu.dynamic_rotate %0 by %c240_i32 dim 1 : vector<8x256xf32>, i32 -> vector<8x256xf32>
    %35 = vector.extract_strided_slice %3 {offsets = [7, 0, 0], sizes = [1, 1, 256], strides = [1, 1, 1]} : vector<9x1x256xf32> to vector<1x1x256xf32>
    %36 = vector.shape_cast %35 : vector<1x1x256xf32> to vector<1x256xf32>
    %37 = vector.broadcast %36 : vector<1x256xf32> to vector<8x256xf32>
    %38 = arith.mulf %34, %37 : vector<8x256xf32>
    %c239_i32 = arith.constant 239 : i32
    %39 = tpu.dynamic_rotate %0 by %c239_i32 dim 1 : vector<8x256xf32>, i32 -> vector<8x256xf32>
    %40 = vector.extract_strided_slice %3 {offsets = [8, 0, 0], sizes = [1, 1, 256], strides = [1, 1, 1]} : vector<9x1x256xf32> to vector<1x1x256xf32>
    %41 = vector.shape_cast %40 : vector<1x1x256xf32> to vector<1x256xf32>
    %42 = vector.broadcast %41 : vector<1x256xf32> to vector<8x256xf32>
    %43 = arith.mulf %39, %42 : vector<8x256xf32>
    %44 = tpu.concatenate %8, %13, %18, %23, %0, %28, %33, %38, %43 in 0 : vector<8x256xf32>, vector<8x256xf32>, vector<8x256xf32>, vector<8x256xf32>, vector<8x256xf32>, vector<8x256xf32>, vector<8x256xf32>, vector<8x256xf32>, vector<8x256xf32> -> vector<72x256xf32>
    %cst = arith.constant dense<0.000000e+00> : vector<8x256xf32>
    %45 = tpu.matmul %1, %44, %cst {dimension_numbers = #tpu.dot_dimension_numbers<[1], [0], [0], [1], [0, 0, 1, 1], [], []>} : vector<8x72xf32>, vector<72x256xf32>, vector<8x256xf32> -> vector<8x256xf32>
    %46 = vector.broadcast %2 : vector<8x1xf32> to vector<8x256xf32>
    %47 = arith.addf %45, %46 : vector<8x256xf32>
    %c3_i32 = arith.constant 3 : i32
    %48 = arith.muli %c3_i32, %c0_i32 : i32
    %49 = arith.index_cast %48 : i32 to index
    %50 = memref.load %arg0[%49] : memref<24xf32, #tpu.memory_space<smem>>
    %c3_i32_8 = arith.constant 3 : i32
    %51 = arith.muli %c3_i32_8, %c0_i32 : i32
    %c1_i32_9 = arith.constant 1 : i32
    %52 = arith.addi %51, %c1_i32_9 : i32
    %53 = arith.index_cast %52 : i32 to index
    %54 = memref.load %arg0[%53] : memref<24xf32, #tpu.memory_space<smem>>
    %c3_i32_10 = arith.constant 3 : i32
    %55 = arith.muli %c3_i32_10, %c0_i32 : i32
    %c2_i32 = arith.constant 2 : i32
    %56 = arith.addi %55, %c2_i32 : i32
    %57 = arith.index_cast %56 : i32 to index
    %58 = memref.load %arg0[%57] : memref<24xf32, #tpu.memory_space<smem>>
    %59 = vector.broadcast %50 : f32 to vector<8x256xf32>
    %60 = arith.mulf %59, %0 : vector<8x256xf32>
    %61 = vector.broadcast %54 : f32 to vector<8x256xf32>
    %62 = arith.mulf %61, %47 : vector<8x256xf32>
    %63 = arith.addf %60, %62 : vector<8x256xf32>
    %64 = arith.index_cast %c0_i32 : i32 to index
    %c0_11 = arith.constant 0 : index
    %c0_12 = arith.constant 0 : index
    %65 = vector.load %arg5[%64, %c0_11, %c0_12] : memref<8x8x256xf32, #tpu.memory_space<vmem>>, vector<1x8x256xf32>
    %66 = vector.shape_cast %65 : vector<1x8x256xf32> to vector<8x256xf32>
    %67 = vector.broadcast %58 : f32 to vector<8x256xf32>
    %68 = arith.mulf %67, %66 : vector<8x256xf32>
    %69 = arith.addf %63, %68 : vector<8x256xf32>
    %c1_i32_13 = arith.constant 1 : i32
    %c17_i32_14 = arith.constant 17 : i32
    %70 = tpu.dynamic_rotate %69 by %c17_i32_14 dim 1 : vector<8x256xf32>, i32 -> vector<8x256xf32>
    %71 = vector.extract_strided_slice %3 {offsets = [0, 0, 0], sizes = [1, 1, 256], strides = [1, 1, 1]} : vector<9x1x256xf32> to vector<1x1x256xf32>
    %72 = vector.shape_cast %71 : vector<1x1x256xf32> to vector<1x256xf32>
    %73 = vector.broadcast %72 : vector<1x256xf32> to vector<8x256xf32>
    %74 = arith.mulf %70, %73 : vector<8x256xf32>
    %c16_i32_15 = arith.constant 16 : i32
    %75 = tpu.dynamic_rotate %69 by %c16_i32_15 dim 1 : vector<8x256xf32>, i32 -> vector<8x256xf32>
    %76 = vector.extract_strided_slice %3 {offsets = [1, 0, 0], sizes = [1, 1, 256], strides = [1, 1, 1]} : vector<9x1x256xf32> to vector<1x1x256xf32>
    %77 = vector.shape_cast %76 : vector<1x1x256xf32> to vector<1x256xf32>
    %78 = vector.broadcast %77 : vector<1x256xf32> to vector<8x256xf32>
    %79 = arith.mulf %75, %78 : vector<8x256xf32>
    %c15_i32_16 = arith.constant 15 : i32
    %80 = tpu.dynamic_rotate %69 by %c15_i32_16 dim 1 : vector<8x256xf32>, i32 -> vector<8x256xf32>
    %81 = vector.extract_strided_slice %3 {offsets = [2, 0, 0], sizes = [1, 1, 256], strides = [1, 1, 1]} : vector<9x1x256xf32> to vector<1x1x256xf32>
    %82 = vector.shape_cast %81 : vector<1x1x256xf32> to vector<1x256xf32>
    %83 = vector.broadcast %82 : vector<1x256xf32> to vector<8x256xf32>
    %84 = arith.mulf %80, %83 : vector<8x256xf32>
    %c1_i32_17 = arith.constant 1 : i32
    %85 = tpu.dynamic_rotate %69 by %c1_i32_17 dim 1 : vector<8x256xf32>, i32 -> vector<8x256xf32>
    %86 = vector.extract_strided_slice %3 {offsets = [3, 0, 0], sizes = [1, 1, 256], strides = [1, 1, 1]} : vector<9x1x256xf32> to vector<1x1x256xf32>
    %87 = vector.shape_cast %86 : vector<1x1x256xf32> to vector<1x256xf32>
    %88 = vector.broadcast %87 : vector<1x256xf32> to vector<8x256xf32>
    %89 = arith.mulf %85, %88 : vector<8x256xf32>
    %c255_i32_18 = arith.constant 255 : i32
    %90 = tpu.dynamic_rotate %69 by %c255_i32_18 dim 1 : vector<8x256xf32>, i32 -> vector<8x256xf32>
    %91 = vector.extract_strided_slice %3 {offsets = [5, 0, 0], sizes = [1, 1, 256], strides = [1, 1, 1]} : vector<9x1x256xf32> to vector<1x1x256xf32>
    %92 = vector.shape_cast %91 : vector<1x1x256xf32> to vector<1x256xf32>
    %93 = vector.broadcast %92 : vector<1x256xf32> to vector<8x256xf32>
    %94 = arith.mulf %90, %93 : vector<8x256xf32>
    %c241_i32_19 = arith.constant 241 : i32
    %95 = tpu.dynamic_rotate %69 by %c241_i32_19 dim 1 : vector<8x256xf32>, i32 -> vector<8x256xf32>
    %96 = vector.extract_strided_slice %3 {offsets = [6, 0, 0], sizes = [1, 1, 256], strides = [1, 1, 1]} : vector<9x1x256xf32> to vector<1x1x256xf32>
    %97 = vector.shape_cast %96 : vector<1x1x256xf32> to vector<1x256xf32>
    %98 = vector.broadcast %97 : vector<1x256xf32> to vector<8x256xf32>
    %99 = arith.mulf %95, %98 : vector<8x256xf32>
    %c240_i32_20 = arith.constant 240 : i32
    %100 = tpu.dynamic_rotate %69 by %c240_i32_20 dim 1 : vector<8x256xf32>, i32 -> vector<8x256xf32>
    %101 = vector.extract_strided_slice %3 {offsets = [7, 0, 0], sizes = [1, 1, 256], strides = [1, 1, 1]} : vector<9x1x256xf32> to vector<1x1x256xf32>
    %102 = vector.shape_cast %101 : vector<1x1x256xf32> to vector<1x256xf32>
    %103 = vector.broadcast %102 : vector<1x256xf32> to vector<8x256xf32>
    %104 = arith.mulf %100, %103 : vector<8x256xf32>
    %c239_i32_21 = arith.constant 239 : i32
    %105 = tpu.dynamic_rotate %69 by %c239_i32_21 dim 1 : vector<8x256xf32>, i32 -> vector<8x256xf32>
    %106 = vector.extract_strided_slice %3 {offsets = [8, 0, 0], sizes = [1, 1, 256], strides = [1, 1, 1]} : vector<9x1x256xf32> to vector<1x1x256xf32>
    %107 = vector.shape_cast %106 : vector<1x1x256xf32> to vector<1x256xf32>
    %108 = vector.broadcast %107 : vector<1x256xf32> to vector<8x256xf32>
    %109 = arith.mulf %105, %108 : vector<8x256xf32>
    %110 = tpu.concatenate %74, %79, %84, %89, %69, %94, %99, %104, %109 in 0 : vector<8x256xf32>, vector<8x256xf32>, vector<8x256xf32>, vector<8x256xf32>, vector<8x256xf32>, vector<8x256xf32>, vector<8x256xf32>, vector<8x256xf32>, vector<8x256xf32> -> vector<72x256xf32>
    %cst_22 = arith.constant dense<0.000000e+00> : vector<8x256xf32>
    %111 = tpu.matmul %1, %110, %cst_22 {dimension_numbers = #tpu.dot_dimension_numbers<[1], [0], [0], [1], [0, 0, 1, 1], [], []>} : vector<8x72xf32>, vector<72x256xf32>, vector<8x256xf32> -> vector<8x256xf32>
    %112 = vector.broadcast %2 : vector<8x1xf32> to vector<8x256xf32>
    %113 = arith.addf %111, %112 : vector<8x256xf32>
    %c3_i32_23 = arith.constant 3 : i32
    %114 = arith.muli %c3_i32_23, %c1_i32_13 : i32
    %115 = arith.index_cast %114 : i32 to index
    %116 = memref.load %arg0[%115] : memref<24xf32, #tpu.memory_space<smem>>
    %c3_i32_24 = arith.constant 3 : i32
    %117 = arith.muli %c3_i32_24, %c1_i32_13 : i32
    %c1_i32_25 = arith.constant 1 : i32
    %118 = arith.addi %117, %c1_i32_25 : i32
    %119 = arith.index_cast %118 : i32 to index
    %120 = memref.load %arg0[%119] : memref<24xf32, #tpu.memory_space<smem>>
    %c3_i32_26 = arith.constant 3 : i32
    %121 = arith.muli %c3_i32_26, %c1_i32_13 : i32
    %c2_i32_27 = arith.constant 2 : i32
    %122 = arith.addi %121, %c2_i32_27 : i32
    %123 = arith.index_cast %122 : i32 to index
    %124 = memref.load %arg0[%123] : memref<24xf32, #tpu.memory_space<smem>>
    %125 = vector.broadcast %116 : f32 to vector<8x256xf32>
    %126 = arith.mulf %125, %69 : vector<8x256xf32>
    %127 = vector.broadcast %120 : f32 to vector<8x256xf32>
    %128 = arith.mulf %127, %113 : vector<8x256xf32>
    %129 = arith.addf %126, %128 : vector<8x256xf32>
    %130 = arith.index_cast %c1_i32_13 : i32 to index
    %c0_28 = arith.constant 0 : index
    %c0_29 = arith.constant 0 : index
    %131 = vector.load %arg5[%130, %c0_28, %c0_29] : memref<8x8x256xf32, #tpu.memory_space<vmem>>, vector<1x8x256xf32>
    %132 = vector.shape_cast %131 : vector<1x8x256xf32> to vector<8x256xf32>
    %133 = vector.broadcast %124 : f32 to vector<8x256xf32>
    %134 = arith.mulf %133, %132 : vector<8x256xf32>
    %135 = arith.addf %129, %134 : vector<8x256xf32>
    %c2_i32_30 = arith.constant 2 : i32
    %c17_i32_31 = arith.constant 17 : i32
    %136 = tpu.dynamic_rotate %135 by %c17_i32_31 dim 1 : vector<8x256xf32>, i32 -> vector<8x256xf32>
    %137 = vector.extract_strided_slice %3 {offsets = [0, 0, 0], sizes = [1, 1, 256], strides = [1, 1, 1]} : vector<9x1x256xf32> to vector<1x1x256xf32>
    %138 = vector.shape_cast %137 : vector<1x1x256xf32> to vector<1x256xf32>
    %139 = vector.broadcast %138 : vector<1x256xf32> to vector<8x256xf32>
    %140 = arith.mulf %136, %139 : vector<8x256xf32>
    %c16_i32_32 = arith.constant 16 : i32
    %141 = tpu.dynamic_rotate %135 by %c16_i32_32 dim 1 : vector<8x256xf32>, i32 -> vector<8x256xf32>
    %142 = vector.extract_strided_slice %3 {offsets = [1, 0, 0], sizes = [1, 1, 256], strides = [1, 1, 1]} : vector<9x1x256xf32> to vector<1x1x256xf32>
    %143 = vector.shape_cast %142 : vector<1x1x256xf32> to vector<1x256xf32>
    %144 = vector.broadcast %143 : vector<1x256xf32> to vector<8x256xf32>
    %145 = arith.mulf %141, %144 : vector<8x256xf32>
    %c15_i32_33 = arith.constant 15 : i32
    %146 = tpu.dynamic_rotate %135 by %c15_i32_33 dim 1 : vector<8x256xf32>, i32 -> vector<8x256xf32>
    %147 = vector.extract_strided_slice %3 {offsets = [2, 0, 0], sizes = [1, 1, 256], strides = [1, 1, 1]} : vector<9x1x256xf32> to vector<1x1x256xf32>
    %148 = vector.shape_cast %147 : vector<1x1x256xf32> to vector<1x256xf32>
    %149 = vector.broadcast %148 : vector<1x256xf32> to vector<8x256xf32>
    %150 = arith.mulf %146, %149 : vector<8x256xf32>
    %c1_i32_34 = arith.constant 1 : i32
    %151 = tpu.dynamic_rotate %135 by %c1_i32_34 dim 1 : vector<8x256xf32>, i32 -> vector<8x256xf32>
    %152 = vector.extract_strided_slice %3 {offsets = [3, 0, 0], sizes = [1, 1, 256], strides = [1, 1, 1]} : vector<9x1x256xf32> to vector<1x1x256xf32>
    %153 = vector.shape_cast %152 : vector<1x1x256xf32> to vector<1x256xf32>
    %154 = vector.broadcast %153 : vector<1x256xf32> to vector<8x256xf32>
    %155 = arith.mulf %151, %154 : vector<8x256xf32>
    %c255_i32_35 = arith.constant 255 : i32
    %156 = tpu.dynamic_rotate %135 by %c255_i32_35 dim 1 : vector<8x256xf32>, i32 -> vector<8x256xf32>
    %157 = vector.extract_strided_slice %3 {offsets = [5, 0, 0], sizes = [1, 1, 256], strides = [1, 1, 1]} : vector<9x1x256xf32> to vector<1x1x256xf32>
    %158 = vector.shape_cast %157 : vector<1x1x256xf32> to vector<1x256xf32>
    %159 = vector.broadcast %158 : vector<1x256xf32> to vector<8x256xf32>
    %160 = arith.mulf %156, %159 : vector<8x256xf32>
    %c241_i32_36 = arith.constant 241 : i32
    %161 = tpu.dynamic_rotate %135 by %c241_i32_36 dim 1 : vector<8x256xf32>, i32 -> vector<8x256xf32>
    %162 = vector.extract_strided_slice %3 {offsets = [6, 0, 0], sizes = [1, 1, 256], strides = [1, 1, 1]} : vector<9x1x256xf32> to vector<1x1x256xf32>
    %163 = vector.shape_cast %162 : vector<1x1x256xf32> to vector<1x256xf32>
    %164 = vector.broadcast %163 : vector<1x256xf32> to vector<8x256xf32>
    %165 = arith.mulf %161, %164 : vector<8x256xf32>
    %c240_i32_37 = arith.constant 240 : i32
    %166 = tpu.dynamic_rotate %135 by %c240_i32_37 dim 1 : vector<8x256xf32>, i32 -> vector<8x256xf32>
    %167 = vector.extract_strided_slice %3 {offsets = [7, 0, 0], sizes = [1, 1, 256], strides = [1, 1, 1]} : vector<9x1x256xf32> to vector<1x1x256xf32>
    %168 = vector.shape_cast %167 : vector<1x1x256xf32> to vector<1x256xf32>
    %169 = vector.broadcast %168 : vector<1x256xf32> to vector<8x256xf32>
    %170 = arith.mulf %166, %169 : vector<8x256xf32>
    %c239_i32_38 = arith.constant 239 : i32
    %171 = tpu.dynamic_rotate %135 by %c239_i32_38 dim 1 : vector<8x256xf32>, i32 -> vector<8x256xf32>
    %172 = vector.extract_strided_slice %3 {offsets = [8, 0, 0], sizes = [1, 1, 256], strides = [1, 1, 1]} : vector<9x1x256xf32> to vector<1x1x256xf32>
    %173 = vector.shape_cast %172 : vector<1x1x256xf32> to vector<1x256xf32>
    %174 = vector.broadcast %173 : vector<1x256xf32> to vector<8x256xf32>
    %175 = arith.mulf %171, %174 : vector<8x256xf32>
    %176 = tpu.concatenate %140, %145, %150, %155, %135, %160, %165, %170, %175 in 0 : vector<8x256xf32>, vector<8x256xf32>, vector<8x256xf32>, vector<8x256xf32>, vector<8x256xf32>, vector<8x256xf32>, vector<8x256xf32>, vector<8x256xf32>, vector<8x256xf32> -> vector<72x256xf32>
    %cst_39 = arith.constant dense<0.000000e+00> : vector<8x256xf32>
    %177 = tpu.matmul %1, %176, %cst_39 {dimension_numbers = #tpu.dot_dimension_numbers<[1], [0], [0], [1], [0, 0, 1, 1], [], []>} : vector<8x72xf32>, vector<72x256xf32>, vector<8x256xf32> -> vector<8x256xf32>
    %178 = vector.broadcast %2 : vector<8x1xf32> to vector<8x256xf32>
    %179 = arith.addf %177, %178 : vector<8x256xf32>
    %c3_i32_40 = arith.constant 3 : i32
    %180 = arith.muli %c3_i32_40, %c2_i32_30 : i32
    %181 = arith.index_cast %180 : i32 to index
    %182 = memref.load %arg0[%181] : memref<24xf32, #tpu.memory_space<smem>>
    %c3_i32_41 = arith.constant 3 : i32
    %183 = arith.muli %c3_i32_41, %c2_i32_30 : i32
    %c1_i32_42 = arith.constant 1 : i32
    %184 = arith.addi %183, %c1_i32_42 : i32
    %185 = arith.index_cast %184 : i32 to index
    %186 = memref.load %arg0[%185] : memref<24xf32, #tpu.memory_space<smem>>
    %c3_i32_43 = arith.constant 3 : i32
    %187 = arith.muli %c3_i32_43, %c2_i32_30 : i32
    %c2_i32_44 = arith.constant 2 : i32
    %188 = arith.addi %187, %c2_i32_44 : i32
    %189 = arith.index_cast %188 : i32 to index
    %190 = memref.load %arg0[%189] : memref<24xf32, #tpu.memory_space<smem>>
    %191 = vector.broadcast %182 : f32 to vector<8x256xf32>
    %192 = arith.mulf %191, %135 : vector<8x256xf32>
    %193 = vector.broadcast %186 : f32 to vector<8x256xf32>
    %194 = arith.mulf %193, %179 : vector<8x256xf32>
    %195 = arith.addf %192, %194 : vector<8x256xf32>
    %196 = arith.index_cast %c2_i32_30 : i32 to index
    %c0_45 = arith.constant 0 : index
    %c0_46 = arith.constant 0 : index
    %197 = vector.load %arg5[%196, %c0_45, %c0_46] : memref<8x8x256xf32, #tpu.memory_space<vmem>>, vector<1x8x256xf32>
    %198 = vector.shape_cast %197 : vector<1x8x256xf32> to vector<8x256xf32>
    %199 = vector.broadcast %190 : f32 to vector<8x256xf32>
    %200 = arith.mulf %199, %198 : vector<8x256xf32>
    %201 = arith.addf %195, %200 : vector<8x256xf32>
    %c3_i32_47 = arith.constant 3 : i32
    %c17_i32_48 = arith.constant 17 : i32
    %202 = tpu.dynamic_rotate %201 by %c17_i32_48 dim 1 : vector<8x256xf32>, i32 -> vector<8x256xf32>
    %203 = vector.extract_strided_slice %3 {offsets = [0, 0, 0], sizes = [1, 1, 256], strides = [1, 1, 1]} : vector<9x1x256xf32> to vector<1x1x256xf32>
    %204 = vector.shape_cast %203 : vector<1x1x256xf32> to vector<1x256xf32>
    %205 = vector.broadcast %204 : vector<1x256xf32> to vector<8x256xf32>
    %206 = arith.mulf %202, %205 : vector<8x256xf32>
    %c16_i32_49 = arith.constant 16 : i32
    %207 = tpu.dynamic_rotate %201 by %c16_i32_49 dim 1 : vector<8x256xf32>, i32 -> vector<8x256xf32>
    %208 = vector.extract_strided_slice %3 {offsets = [1, 0, 0], sizes = [1, 1, 256], strides = [1, 1, 1]} : vector<9x1x256xf32> to vector<1x1x256xf32>
    %209 = vector.shape_cast %208 : vector<1x1x256xf32> to vector<1x256xf32>
    %210 = vector.broadcast %209 : vector<1x256xf32> to vector<8x256xf32>
    %211 = arith.mulf %207, %210 : vector<8x256xf32>
    %c15_i32_50 = arith.constant 15 : i32
    %212 = tpu.dynamic_rotate %201 by %c15_i32_50 dim 1 : vector<8x256xf32>, i32 -> vector<8x256xf32>
    %213 = vector.extract_strided_slice %3 {offsets = [2, 0, 0], sizes = [1, 1, 256], strides = [1, 1, 1]} : vector<9x1x256xf32> to vector<1x1x256xf32>
    %214 = vector.shape_cast %213 : vector<1x1x256xf32> to vector<1x256xf32>
    %215 = vector.broadcast %214 : vector<1x256xf32> to vector<8x256xf32>
    %216 = arith.mulf %212, %215 : vector<8x256xf32>
    %c1_i32_51 = arith.constant 1 : i32
    %217 = tpu.dynamic_rotate %201 by %c1_i32_51 dim 1 : vector<8x256xf32>, i32 -> vector<8x256xf32>
    %218 = vector.extract_strided_slice %3 {offsets = [3, 0, 0], sizes = [1, 1, 256], strides = [1, 1, 1]} : vector<9x1x256xf32> to vector<1x1x256xf32>
    %219 = vector.shape_cast %218 : vector<1x1x256xf32> to vector<1x256xf32>
    %220 = vector.broadcast %219 : vector<1x256xf32> to vector<8x256xf32>
    %221 = arith.mulf %217, %220 : vector<8x256xf32>
    %c255_i32_52 = arith.constant 255 : i32
    %222 = tpu.dynamic_rotate %201 by %c255_i32_52 dim 1 : vector<8x256xf32>, i32 -> vector<8x256xf32>
    %223 = vector.extract_strided_slice %3 {offsets = [5, 0, 0], sizes = [1, 1, 256], strides = [1, 1, 1]} : vector<9x1x256xf32> to vector<1x1x256xf32>
    %224 = vector.shape_cast %223 : vector<1x1x256xf32> to vector<1x256xf32>
    %225 = vector.broadcast %224 : vector<1x256xf32> to vector<8x256xf32>
    %226 = arith.mulf %222, %225 : vector<8x256xf32>
    %c241_i32_53 = arith.constant 241 : i32
    %227 = tpu.dynamic_rotate %201 by %c241_i32_53 dim 1 : vector<8x256xf32>, i32 -> vector<8x256xf32>
    %228 = vector.extract_strided_slice %3 {offsets = [6, 0, 0], sizes = [1, 1, 256], strides = [1, 1, 1]} : vector<9x1x256xf32> to vector<1x1x256xf32>
    %229 = vector.shape_cast %228 : vector<1x1x256xf32> to vector<1x256xf32>
    %230 = vector.broadcast %229 : vector<1x256xf32> to vector<8x256xf32>
    %231 = arith.mulf %227, %230 : vector<8x256xf32>
    %c240_i32_54 = arith.constant 240 : i32
    %232 = tpu.dynamic_rotate %201 by %c240_i32_54 dim 1 : vector<8x256xf32>, i32 -> vector<8x256xf32>
    %233 = vector.extract_strided_slice %3 {offsets = [7, 0, 0], sizes = [1, 1, 256], strides = [1, 1, 1]} : vector<9x1x256xf32> to vector<1x1x256xf32>
    %234 = vector.shape_cast %233 : vector<1x1x256xf32> to vector<1x256xf32>
    %235 = vector.broadcast %234 : vector<1x256xf32> to vector<8x256xf32>
    %236 = arith.mulf %232, %235 : vector<8x256xf32>
    %c239_i32_55 = arith.constant 239 : i32
    %237 = tpu.dynamic_rotate %201 by %c239_i32_55 dim 1 : vector<8x256xf32>, i32 -> vector<8x256xf32>
    %238 = vector.extract_strided_slice %3 {offsets = [8, 0, 0], sizes = [1, 1, 256], strides = [1, 1, 1]} : vector<9x1x256xf32> to vector<1x1x256xf32>
    %239 = vector.shape_cast %238 : vector<1x1x256xf32> to vector<1x256xf32>
    %240 = vector.broadcast %239 : vector<1x256xf32> to vector<8x256xf32>
    %241 = arith.mulf %237, %240 : vector<8x256xf32>
    %242 = tpu.concatenate %206, %211, %216, %221, %201, %226, %231, %236, %241 in 0 : vector<8x256xf32>, vector<8x256xf32>, vector<8x256xf32>, vector<8x256xf32>, vector<8x256xf32>, vector<8x256xf32>, vector<8x256xf32>, vector<8x256xf32>, vector<8x256xf32> -> vector<72x256xf32>
    %cst_56 = arith.constant dense<0.000000e+00> : vector<8x256xf32>
    %243 = tpu.matmul %1, %242, %cst_56 {dimension_numbers = #tpu.dot_dimension_numbers<[1], [0], [0], [1], [0, 0, 1, 1], [], []>} : vector<8x72xf32>, vector<72x256xf32>, vector<8x256xf32> -> vector<8x256xf32>
    %244 = vector.broadcast %2 : vector<8x1xf32> to vector<8x256xf32>
    %245 = arith.addf %243, %244 : vector<8x256xf32>
    %c3_i32_57 = arith.constant 3 : i32
    %246 = arith.muli %c3_i32_57, %c3_i32_47 : i32
    %247 = arith.index_cast %246 : i32 to index
    %248 = memref.load %arg0[%247] : memref<24xf32, #tpu.memory_space<smem>>
    %c3_i32_58 = arith.constant 3 : i32
    %249 = arith.muli %c3_i32_58, %c3_i32_47 : i32
    %c1_i32_59 = arith.constant 1 : i32
    %250 = arith.addi %249, %c1_i32_59 : i32
    %251 = arith.index_cast %250 : i32 to index
    %252 = memref.load %arg0[%251] : memref<24xf32, #tpu.memory_space<smem>>
    %c3_i32_60 = arith.constant 3 : i32
    %253 = arith.muli %c3_i32_60, %c3_i32_47 : i32
    %c2_i32_61 = arith.constant 2 : i32
    %254 = arith.addi %253, %c2_i32_61 : i32
    %255 = arith.index_cast %254 : i32 to index
    %256 = memref.load %arg0[%255] : memref<24xf32, #tpu.memory_space<smem>>
    %257 = vector.broadcast %248 : f32 to vector<8x256xf32>
    %258 = arith.mulf %257, %201 : vector<8x256xf32>
    %259 = vector.broadcast %252 : f32 to vector<8x256xf32>
    %260 = arith.mulf %259, %245 : vector<8x256xf32>
    %261 = arith.addf %258, %260 : vector<8x256xf32>
    %262 = arith.index_cast %c3_i32_47 : i32 to index
    %c0_62 = arith.constant 0 : index
    %c0_63 = arith.constant 0 : index
    %263 = vector.load %arg5[%262, %c0_62, %c0_63] : memref<8x8x256xf32, #tpu.memory_space<vmem>>, vector<1x8x256xf32>
    %264 = vector.shape_cast %263 : vector<1x8x256xf32> to vector<8x256xf32>
    %265 = vector.broadcast %256 : f32 to vector<8x256xf32>
    %266 = arith.mulf %265, %264 : vector<8x256xf32>
    %267 = arith.addf %261, %266 : vector<8x256xf32>
    %c4_i32 = arith.constant 4 : i32
    %c17_i32_64 = arith.constant 17 : i32
    %268 = tpu.dynamic_rotate %267 by %c17_i32_64 dim 1 : vector<8x256xf32>, i32 -> vector<8x256xf32>
    %269 = vector.extract_strided_slice %3 {offsets = [0, 0, 0], sizes = [1, 1, 256], strides = [1, 1, 1]} : vector<9x1x256xf32> to vector<1x1x256xf32>
    %270 = vector.shape_cast %269 : vector<1x1x256xf32> to vector<1x256xf32>
    %271 = vector.broadcast %270 : vector<1x256xf32> to vector<8x256xf32>
    %272 = arith.mulf %268, %271 : vector<8x256xf32>
    %c16_i32_65 = arith.constant 16 : i32
    %273 = tpu.dynamic_rotate %267 by %c16_i32_65 dim 1 : vector<8x256xf32>, i32 -> vector<8x256xf32>
    %274 = vector.extract_strided_slice %3 {offsets = [1, 0, 0], sizes = [1, 1, 256], strides = [1, 1, 1]} : vector<9x1x256xf32> to vector<1x1x256xf32>
    %275 = vector.shape_cast %274 : vector<1x1x256xf32> to vector<1x256xf32>
    %276 = vector.broadcast %275 : vector<1x256xf32> to vector<8x256xf32>
    %277 = arith.mulf %273, %276 : vector<8x256xf32>
    %c15_i32_66 = arith.constant 15 : i32
    %278 = tpu.dynamic_rotate %267 by %c15_i32_66 dim 1 : vector<8x256xf32>, i32 -> vector<8x256xf32>
    %279 = vector.extract_strided_slice %3 {offsets = [2, 0, 0], sizes = [1, 1, 256], strides = [1, 1, 1]} : vector<9x1x256xf32> to vector<1x1x256xf32>
    %280 = vector.shape_cast %279 : vector<1x1x256xf32> to vector<1x256xf32>
    %281 = vector.broadcast %280 : vector<1x256xf32> to vector<8x256xf32>
    %282 = arith.mulf %278, %281 : vector<8x256xf32>
    %c1_i32_67 = arith.constant 1 : i32
    %283 = tpu.dynamic_rotate %267 by %c1_i32_67 dim 1 : vector<8x256xf32>, i32 -> vector<8x256xf32>
    %284 = vector.extract_strided_slice %3 {offsets = [3, 0, 0], sizes = [1, 1, 256], strides = [1, 1, 1]} : vector<9x1x256xf32> to vector<1x1x256xf32>
    %285 = vector.shape_cast %284 : vector<1x1x256xf32> to vector<1x256xf32>
    %286 = vector.broadcast %285 : vector<1x256xf32> to vector<8x256xf32>
    %287 = arith.mulf %283, %286 : vector<8x256xf32>
    %c255_i32_68 = arith.constant 255 : i32
    %288 = tpu.dynamic_rotate %267 by %c255_i32_68 dim 1 : vector<8x256xf32>, i32 -> vector<8x256xf32>
    %289 = vector.extract_strided_slice %3 {offsets = [5, 0, 0], sizes = [1, 1, 256], strides = [1, 1, 1]} : vector<9x1x256xf32> to vector<1x1x256xf32>
    %290 = vector.shape_cast %289 : vector<1x1x256xf32> to vector<1x256xf32>
    %291 = vector.broadcast %290 : vector<1x256xf32> to vector<8x256xf32>
    %292 = arith.mulf %288, %291 : vector<8x256xf32>
    %c241_i32_69 = arith.constant 241 : i32
    %293 = tpu.dynamic_rotate %267 by %c241_i32_69 dim 1 : vector<8x256xf32>, i32 -> vector<8x256xf32>
    %294 = vector.extract_strided_slice %3 {offsets = [6, 0, 0], sizes = [1, 1, 256], strides = [1, 1, 1]} : vector<9x1x256xf32> to vector<1x1x256xf32>
    %295 = vector.shape_cast %294 : vector<1x1x256xf32> to vector<1x256xf32>
    %296 = vector.broadcast %295 : vector<1x256xf32> to vector<8x256xf32>
    %297 = arith.mulf %293, %296 : vector<8x256xf32>
    %c240_i32_70 = arith.constant 240 : i32
    %298 = tpu.dynamic_rotate %267 by %c240_i32_70 dim 1 : vector<8x256xf32>, i32 -> vector<8x256xf32>
    %299 = vector.extract_strided_slice %3 {offsets = [7, 0, 0], sizes = [1, 1, 256], strides = [1, 1, 1]} : vector<9x1x256xf32> to vector<1x1x256xf32>
    %300 = vector.shape_cast %299 : vector<1x1x256xf32> to vector<1x256xf32>
    %301 = vector.broadcast %300 : vector<1x256xf32> to vector<8x256xf32>
    %302 = arith.mulf %298, %301 : vector<8x256xf32>
    %c239_i32_71 = arith.constant 239 : i32
    %303 = tpu.dynamic_rotate %267 by %c239_i32_71 dim 1 : vector<8x256xf32>, i32 -> vector<8x256xf32>
    %304 = vector.extract_strided_slice %3 {offsets = [8, 0, 0], sizes = [1, 1, 256], strides = [1, 1, 1]} : vector<9x1x256xf32> to vector<1x1x256xf32>
    %305 = vector.shape_cast %304 : vector<1x1x256xf32> to vector<1x256xf32>
    %306 = vector.broadcast %305 : vector<1x256xf32> to vector<8x256xf32>
    %307 = arith.mulf %303, %306 : vector<8x256xf32>
    %308 = tpu.concatenate %272, %277, %282, %287, %267, %292, %297, %302, %307 in 0 : vector<8x256xf32>, vector<8x256xf32>, vector<8x256xf32>, vector<8x256xf32>, vector<8x256xf32>, vector<8x256xf32>, vector<8x256xf32>, vector<8x256xf32>, vector<8x256xf32> -> vector<72x256xf32>
    %cst_72 = arith.constant dense<0.000000e+00> : vector<8x256xf32>
    %309 = tpu.matmul %1, %308, %cst_72 {dimension_numbers = #tpu.dot_dimension_numbers<[1], [0], [0], [1], [0, 0, 1, 1], [], []>} : vector<8x72xf32>, vector<72x256xf32>, vector<8x256xf32> -> vector<8x256xf32>
    %310 = vector.broadcast %2 : vector<8x1xf32> to vector<8x256xf32>
    %311 = arith.addf %309, %310 : vector<8x256xf32>
    %c3_i32_73 = arith.constant 3 : i32
    %312 = arith.muli %c3_i32_73, %c4_i32 : i32
    %313 = arith.index_cast %312 : i32 to index
    %314 = memref.load %arg0[%313] : memref<24xf32, #tpu.memory_space<smem>>
    %c3_i32_74 = arith.constant 3 : i32
    %315 = arith.muli %c3_i32_74, %c4_i32 : i32
    %c1_i32_75 = arith.constant 1 : i32
    %316 = arith.addi %315, %c1_i32_75 : i32
    %317 = arith.index_cast %316 : i32 to index
    %318 = memref.load %arg0[%317] : memref<24xf32, #tpu.memory_space<smem>>
    %c3_i32_76 = arith.constant 3 : i32
    %319 = arith.muli %c3_i32_76, %c4_i32 : i32
    %c2_i32_77 = arith.constant 2 : i32
    %320 = arith.addi %319, %c2_i32_77 : i32
    %321 = arith.index_cast %320 : i32 to index
    %322 = memref.load %arg0[%321] : memref<24xf32, #tpu.memory_space<smem>>
    %323 = vector.broadcast %314 : f32 to vector<8x256xf32>
    %324 = arith.mulf %323, %267 : vector<8x256xf32>
    %325 = vector.broadcast %318 : f32 to vector<8x256xf32>
    %326 = arith.mulf %325, %311 : vector<8x256xf32>
    %327 = arith.addf %324, %326 : vector<8x256xf32>
    %328 = arith.index_cast %c4_i32 : i32 to index
    %c0_78 = arith.constant 0 : index
    %c0_79 = arith.constant 0 : index
    %329 = vector.load %arg5[%328, %c0_78, %c0_79] : memref<8x8x256xf32, #tpu.memory_space<vmem>>, vector<1x8x256xf32>
    %330 = vector.shape_cast %329 : vector<1x8x256xf32> to vector<8x256xf32>
    %331 = vector.broadcast %322 : f32 to vector<8x256xf32>
    %332 = arith.mulf %331, %330 : vector<8x256xf32>
    %333 = arith.addf %327, %332 : vector<8x256xf32>
    %c5_i32 = arith.constant 5 : i32
    %c17_i32_80 = arith.constant 17 : i32
    %334 = tpu.dynamic_rotate %333 by %c17_i32_80 dim 1 : vector<8x256xf32>, i32 -> vector<8x256xf32>
    %335 = vector.extract_strided_slice %3 {offsets = [0, 0, 0], sizes = [1, 1, 256], strides = [1, 1, 1]} : vector<9x1x256xf32> to vector<1x1x256xf32>
    %336 = vector.shape_cast %335 : vector<1x1x256xf32> to vector<1x256xf32>
    %337 = vector.broadcast %336 : vector<1x256xf32> to vector<8x256xf32>
    %338 = arith.mulf %334, %337 : vector<8x256xf32>
    %c16_i32_81 = arith.constant 16 : i32
    %339 = tpu.dynamic_rotate %333 by %c16_i32_81 dim 1 : vector<8x256xf32>, i32 -> vector<8x256xf32>
    %340 = vector.extract_strided_slice %3 {offsets = [1, 0, 0], sizes = [1, 1, 256], strides = [1, 1, 1]} : vector<9x1x256xf32> to vector<1x1x256xf32>
    %341 = vector.shape_cast %340 : vector<1x1x256xf32> to vector<1x256xf32>
    %342 = vector.broadcast %341 : vector<1x256xf32> to vector<8x256xf32>
    %343 = arith.mulf %339, %342 : vector<8x256xf32>
    %c15_i32_82 = arith.constant 15 : i32
    %344 = tpu.dynamic_rotate %333 by %c15_i32_82 dim 1 : vector<8x256xf32>, i32 -> vector<8x256xf32>
    %345 = vector.extract_strided_slice %3 {offsets = [2, 0, 0], sizes = [1, 1, 256], strides = [1, 1, 1]} : vector<9x1x256xf32> to vector<1x1x256xf32>
    %346 = vector.shape_cast %345 : vector<1x1x256xf32> to vector<1x256xf32>
    %347 = vector.broadcast %346 : vector<1x256xf32> to vector<8x256xf32>
    %348 = arith.mulf %344, %347 : vector<8x256xf32>
    %c1_i32_83 = arith.constant 1 : i32
    %349 = tpu.dynamic_rotate %333 by %c1_i32_83 dim 1 : vector<8x256xf32>, i32 -> vector<8x256xf32>
    %350 = vector.extract_strided_slice %3 {offsets = [3, 0, 0], sizes = [1, 1, 256], strides = [1, 1, 1]} : vector<9x1x256xf32> to vector<1x1x256xf32>
    %351 = vector.shape_cast %350 : vector<1x1x256xf32> to vector<1x256xf32>
    %352 = vector.broadcast %351 : vector<1x256xf32> to vector<8x256xf32>
    %353 = arith.mulf %349, %352 : vector<8x256xf32>
    %c255_i32_84 = arith.constant 255 : i32
    %354 = tpu.dynamic_rotate %333 by %c255_i32_84 dim 1 : vector<8x256xf32>, i32 -> vector<8x256xf32>
    %355 = vector.extract_strided_slice %3 {offsets = [5, 0, 0], sizes = [1, 1, 256], strides = [1, 1, 1]} : vector<9x1x256xf32> to vector<1x1x256xf32>
    %356 = vector.shape_cast %355 : vector<1x1x256xf32> to vector<1x256xf32>
    %357 = vector.broadcast %356 : vector<1x256xf32> to vector<8x256xf32>
    %358 = arith.mulf %354, %357 : vector<8x256xf32>
    %c241_i32_85 = arith.constant 241 : i32
    %359 = tpu.dynamic_rotate %333 by %c241_i32_85 dim 1 : vector<8x256xf32>, i32 -> vector<8x256xf32>
    %360 = vector.extract_strided_slice %3 {offsets = [6, 0, 0], sizes = [1, 1, 256], strides = [1, 1, 1]} : vector<9x1x256xf32> to vector<1x1x256xf32>
    %361 = vector.shape_cast %360 : vector<1x1x256xf32> to vector<1x256xf32>
    %362 = vector.broadcast %361 : vector<1x256xf32> to vector<8x256xf32>
    %363 = arith.mulf %359, %362 : vector<8x256xf32>
    %c240_i32_86 = arith.constant 240 : i32
    %364 = tpu.dynamic_rotate %333 by %c240_i32_86 dim 1 : vector<8x256xf32>, i32 -> vector<8x256xf32>
    %365 = vector.extract_strided_slice %3 {offsets = [7, 0, 0], sizes = [1, 1, 256], strides = [1, 1, 1]} : vector<9x1x256xf32> to vector<1x1x256xf32>
    %366 = vector.shape_cast %365 : vector<1x1x256xf32> to vector<1x256xf32>
    %367 = vector.broadcast %366 : vector<1x256xf32> to vector<8x256xf32>
    %368 = arith.mulf %364, %367 : vector<8x256xf32>
    %c239_i32_87 = arith.constant 239 : i32
    %369 = tpu.dynamic_rotate %333 by %c239_i32_87 dim 1 : vector<8x256xf32>, i32 -> vector<8x256xf32>
    %370 = vector.extract_strided_slice %3 {offsets = [8, 0, 0], sizes = [1, 1, 256], strides = [1, 1, 1]} : vector<9x1x256xf32> to vector<1x1x256xf32>
    %371 = vector.shape_cast %370 : vector<1x1x256xf32> to vector<1x256xf32>
    %372 = vector.broadcast %371 : vector<1x256xf32> to vector<8x256xf32>
    %373 = arith.mulf %369, %372 : vector<8x256xf32>
    %374 = tpu.concatenate %338, %343, %348, %353, %333, %358, %363, %368, %373 in 0 : vector<8x256xf32>, vector<8x256xf32>, vector<8x256xf32>, vector<8x256xf32>, vector<8x256xf32>, vector<8x256xf32>, vector<8x256xf32>, vector<8x256xf32>, vector<8x256xf32> -> vector<72x256xf32>
    %cst_88 = arith.constant dense<0.000000e+00> : vector<8x256xf32>
    %375 = tpu.matmul %1, %374, %cst_88 {dimension_numbers = #tpu.dot_dimension_numbers<[1], [0], [0], [1], [0, 0, 1, 1], [], []>} : vector<8x72xf32>, vector<72x256xf32>, vector<8x256xf32> -> vector<8x256xf32>
    %376 = vector.broadcast %2 : vector<8x1xf32> to vector<8x256xf32>
    %377 = arith.addf %375, %376 : vector<8x256xf32>
    %c3_i32_89 = arith.constant 3 : i32
    %378 = arith.muli %c3_i32_89, %c5_i32 : i32
    %379 = arith.index_cast %378 : i32 to index
    %380 = memref.load %arg0[%379] : memref<24xf32, #tpu.memory_space<smem>>
    %c3_i32_90 = arith.constant 3 : i32
    %381 = arith.muli %c3_i32_90, %c5_i32 : i32
    %c1_i32_91 = arith.constant 1 : i32
    %382 = arith.addi %381, %c1_i32_91 : i32
    %383 = arith.index_cast %382 : i32 to index
    %384 = memref.load %arg0[%383] : memref<24xf32, #tpu.memory_space<smem>>
    %c3_i32_92 = arith.constant 3 : i32
    %385 = arith.muli %c3_i32_92, %c5_i32 : i32
    %c2_i32_93 = arith.constant 2 : i32
    %386 = arith.addi %385, %c2_i32_93 : i32
    %387 = arith.index_cast %386 : i32 to index
    %388 = memref.load %arg0[%387] : memref<24xf32, #tpu.memory_space<smem>>
    %389 = vector.broadcast %380 : f32 to vector<8x256xf32>
    %390 = arith.mulf %389, %333 : vector<8x256xf32>
    %391 = vector.broadcast %384 : f32 to vector<8x256xf32>
    %392 = arith.mulf %391, %377 : vector<8x256xf32>
    %393 = arith.addf %390, %392 : vector<8x256xf32>
    %394 = arith.index_cast %c5_i32 : i32 to index
    %c0_94 = arith.constant 0 : index
    %c0_95 = arith.constant 0 : index
    %395 = vector.load %arg5[%394, %c0_94, %c0_95] : memref<8x8x256xf32, #tpu.memory_space<vmem>>, vector<1x8x256xf32>
    %396 = vector.shape_cast %395 : vector<1x8x256xf32> to vector<8x256xf32>
    %397 = vector.broadcast %388 : f32 to vector<8x256xf32>
    %398 = arith.mulf %397, %396 : vector<8x256xf32>
    %399 = arith.addf %393, %398 : vector<8x256xf32>
    %c6_i32 = arith.constant 6 : i32
    %c17_i32_96 = arith.constant 17 : i32
    %400 = tpu.dynamic_rotate %399 by %c17_i32_96 dim 1 : vector<8x256xf32>, i32 -> vector<8x256xf32>
    %401 = vector.extract_strided_slice %3 {offsets = [0, 0, 0], sizes = [1, 1, 256], strides = [1, 1, 1]} : vector<9x1x256xf32> to vector<1x1x256xf32>
    %402 = vector.shape_cast %401 : vector<1x1x256xf32> to vector<1x256xf32>
    %403 = vector.broadcast %402 : vector<1x256xf32> to vector<8x256xf32>
    %404 = arith.mulf %400, %403 : vector<8x256xf32>
    %c16_i32_97 = arith.constant 16 : i32
    %405 = tpu.dynamic_rotate %399 by %c16_i32_97 dim 1 : vector<8x256xf32>, i32 -> vector<8x256xf32>
    %406 = vector.extract_strided_slice %3 {offsets = [1, 0, 0], sizes = [1, 1, 256], strides = [1, 1, 1]} : vector<9x1x256xf32> to vector<1x1x256xf32>
    %407 = vector.shape_cast %406 : vector<1x1x256xf32> to vector<1x256xf32>
    %408 = vector.broadcast %407 : vector<1x256xf32> to vector<8x256xf32>
    %409 = arith.mulf %405, %408 : vector<8x256xf32>
    %c15_i32_98 = arith.constant 15 : i32
    %410 = tpu.dynamic_rotate %399 by %c15_i32_98 dim 1 : vector<8x256xf32>, i32 -> vector<8x256xf32>
    %411 = vector.extract_strided_slice %3 {offsets = [2, 0, 0], sizes = [1, 1, 256], strides = [1, 1, 1]} : vector<9x1x256xf32> to vector<1x1x256xf32>
    %412 = vector.shape_cast %411 : vector<1x1x256xf32> to vector<1x256xf32>
    %413 = vector.broadcast %412 : vector<1x256xf32> to vector<8x256xf32>
    %414 = arith.mulf %410, %413 : vector<8x256xf32>
    %c1_i32_99 = arith.constant 1 : i32
    %415 = tpu.dynamic_rotate %399 by %c1_i32_99 dim 1 : vector<8x256xf32>, i32 -> vector<8x256xf32>
    %416 = vector.extract_strided_slice %3 {offsets = [3, 0, 0], sizes = [1, 1, 256], strides = [1, 1, 1]} : vector<9x1x256xf32> to vector<1x1x256xf32>
    %417 = vector.shape_cast %416 : vector<1x1x256xf32> to vector<1x256xf32>
    %418 = vector.broadcast %417 : vector<1x256xf32> to vector<8x256xf32>
    %419 = arith.mulf %415, %418 : vector<8x256xf32>
    %c255_i32_100 = arith.constant 255 : i32
    %420 = tpu.dynamic_rotate %399 by %c255_i32_100 dim 1 : vector<8x256xf32>, i32 -> vector<8x256xf32>
    %421 = vector.extract_strided_slice %3 {offsets = [5, 0, 0], sizes = [1, 1, 256], strides = [1, 1, 1]} : vector<9x1x256xf32> to vector<1x1x256xf32>
    %422 = vector.shape_cast %421 : vector<1x1x256xf32> to vector<1x256xf32>
    %423 = vector.broadcast %422 : vector<1x256xf32> to vector<8x256xf32>
    %424 = arith.mulf %420, %423 : vector<8x256xf32>
    %c241_i32_101 = arith.constant 241 : i32
    %425 = tpu.dynamic_rotate %399 by %c241_i32_101 dim 1 : vector<8x256xf32>, i32 -> vector<8x256xf32>
    %426 = vector.extract_strided_slice %3 {offsets = [6, 0, 0], sizes = [1, 1, 256], strides = [1, 1, 1]} : vector<9x1x256xf32> to vector<1x1x256xf32>
    %427 = vector.shape_cast %426 : vector<1x1x256xf32> to vector<1x256xf32>
    %428 = vector.broadcast %427 : vector<1x256xf32> to vector<8x256xf32>
    %429 = arith.mulf %425, %428 : vector<8x256xf32>
    %c240_i32_102 = arith.constant 240 : i32
    %430 = tpu.dynamic_rotate %399 by %c240_i32_102 dim 1 : vector<8x256xf32>, i32 -> vector<8x256xf32>
    %431 = vector.extract_strided_slice %3 {offsets = [7, 0, 0], sizes = [1, 1, 256], strides = [1, 1, 1]} : vector<9x1x256xf32> to vector<1x1x256xf32>
    %432 = vector.shape_cast %431 : vector<1x1x256xf32> to vector<1x256xf32>
    %433 = vector.broadcast %432 : vector<1x256xf32> to vector<8x256xf32>
    %434 = arith.mulf %430, %433 : vector<8x256xf32>
    %c239_i32_103 = arith.constant 239 : i32
    %435 = tpu.dynamic_rotate %399 by %c239_i32_103 dim 1 : vector<8x256xf32>, i32 -> vector<8x256xf32>
    %436 = vector.extract_strided_slice %3 {offsets = [8, 0, 0], sizes = [1, 1, 256], strides = [1, 1, 1]} : vector<9x1x256xf32> to vector<1x1x256xf32>
    %437 = vector.shape_cast %436 : vector<1x1x256xf32> to vector<1x256xf32>
    %438 = vector.broadcast %437 : vector<1x256xf32> to vector<8x256xf32>
    %439 = arith.mulf %435, %438 : vector<8x256xf32>
    %440 = tpu.concatenate %404, %409, %414, %419, %399, %424, %429, %434, %439 in 0 : vector<8x256xf32>, vector<8x256xf32>, vector<8x256xf32>, vector<8x256xf32>, vector<8x256xf32>, vector<8x256xf32>, vector<8x256xf32>, vector<8x256xf32>, vector<8x256xf32> -> vector<72x256xf32>
    %cst_104 = arith.constant dense<0.000000e+00> : vector<8x256xf32>
    %441 = tpu.matmul %1, %440, %cst_104 {dimension_numbers = #tpu.dot_dimension_numbers<[1], [0], [0], [1], [0, 0, 1, 1], [], []>} : vector<8x72xf32>, vector<72x256xf32>, vector<8x256xf32> -> vector<8x256xf32>
    %442 = vector.broadcast %2 : vector<8x1xf32> to vector<8x256xf32>
    %443 = arith.addf %441, %442 : vector<8x256xf32>
    %c3_i32_105 = arith.constant 3 : i32
    %444 = arith.muli %c3_i32_105, %c6_i32 : i32
    %445 = arith.index_cast %444 : i32 to index
    %446 = memref.load %arg0[%445] : memref<24xf32, #tpu.memory_space<smem>>
    %c3_i32_106 = arith.constant 3 : i32
    %447 = arith.muli %c3_i32_106, %c6_i32 : i32
    %c1_i32_107 = arith.constant 1 : i32
    %448 = arith.addi %447, %c1_i32_107 : i32
    %449 = arith.index_cast %448 : i32 to index
    %450 = memref.load %arg0[%449] : memref<24xf32, #tpu.memory_space<smem>>
    %c3_i32_108 = arith.constant 3 : i32
    %451 = arith.muli %c3_i32_108, %c6_i32 : i32
    %c2_i32_109 = arith.constant 2 : i32
    %452 = arith.addi %451, %c2_i32_109 : i32
    %453 = arith.index_cast %452 : i32 to index
    %454 = memref.load %arg0[%453] : memref<24xf32, #tpu.memory_space<smem>>
    %455 = vector.broadcast %446 : f32 to vector<8x256xf32>
    %456 = arith.mulf %455, %399 : vector<8x256xf32>
    %457 = vector.broadcast %450 : f32 to vector<8x256xf32>
    %458 = arith.mulf %457, %443 : vector<8x256xf32>
    %459 = arith.addf %456, %458 : vector<8x256xf32>
    %460 = arith.index_cast %c6_i32 : i32 to index
    %c0_110 = arith.constant 0 : index
    %c0_111 = arith.constant 0 : index
    %461 = vector.load %arg5[%460, %c0_110, %c0_111] : memref<8x8x256xf32, #tpu.memory_space<vmem>>, vector<1x8x256xf32>
    %462 = vector.shape_cast %461 : vector<1x8x256xf32> to vector<8x256xf32>
    %463 = vector.broadcast %454 : f32 to vector<8x256xf32>
    %464 = arith.mulf %463, %462 : vector<8x256xf32>
    %465 = arith.addf %459, %464 : vector<8x256xf32>
    %c7_i32 = arith.constant 7 : i32
    %c17_i32_112 = arith.constant 17 : i32
    %466 = tpu.dynamic_rotate %465 by %c17_i32_112 dim 1 : vector<8x256xf32>, i32 -> vector<8x256xf32>
    %467 = vector.extract_strided_slice %3 {offsets = [0, 0, 0], sizes = [1, 1, 256], strides = [1, 1, 1]} : vector<9x1x256xf32> to vector<1x1x256xf32>
    %468 = vector.shape_cast %467 : vector<1x1x256xf32> to vector<1x256xf32>
    %469 = vector.broadcast %468 : vector<1x256xf32> to vector<8x256xf32>
    %470 = arith.mulf %466, %469 : vector<8x256xf32>
    %c16_i32_113 = arith.constant 16 : i32
    %471 = tpu.dynamic_rotate %465 by %c16_i32_113 dim 1 : vector<8x256xf32>, i32 -> vector<8x256xf32>
    %472 = vector.extract_strided_slice %3 {offsets = [1, 0, 0], sizes = [1, 1, 256], strides = [1, 1, 1]} : vector<9x1x256xf32> to vector<1x1x256xf32>
    %473 = vector.shape_cast %472 : vector<1x1x256xf32> to vector<1x256xf32>
    %474 = vector.broadcast %473 : vector<1x256xf32> to vector<8x256xf32>
    %475 = arith.mulf %471, %474 : vector<8x256xf32>
    %c15_i32_114 = arith.constant 15 : i32
    %476 = tpu.dynamic_rotate %465 by %c15_i32_114 dim 1 : vector<8x256xf32>, i32 -> vector<8x256xf32>
    %477 = vector.extract_strided_slice %3 {offsets = [2, 0, 0], sizes = [1, 1, 256], strides = [1, 1, 1]} : vector<9x1x256xf32> to vector<1x1x256xf32>
    %478 = vector.shape_cast %477 : vector<1x1x256xf32> to vector<1x256xf32>
    %479 = vector.broadcast %478 : vector<1x256xf32> to vector<8x256xf32>
    %480 = arith.mulf %476, %479 : vector<8x256xf32>
    %c1_i32_115 = arith.constant 1 : i32
    %481 = tpu.dynamic_rotate %465 by %c1_i32_115 dim 1 : vector<8x256xf32>, i32 -> vector<8x256xf32>
    %482 = vector.extract_strided_slice %3 {offsets = [3, 0, 0], sizes = [1, 1, 256], strides = [1, 1, 1]} : vector<9x1x256xf32> to vector<1x1x256xf32>
    %483 = vector.shape_cast %482 : vector<1x1x256xf32> to vector<1x256xf32>
    %484 = vector.broadcast %483 : vector<1x256xf32> to vector<8x256xf32>
    %485 = arith.mulf %481, %484 : vector<8x256xf32>
    %c255_i32_116 = arith.constant 255 : i32
    %486 = tpu.dynamic_rotate %465 by %c255_i32_116 dim 1 : vector<8x256xf32>, i32 -> vector<8x256xf32>
    %487 = vector.extract_strided_slice %3 {offsets = [5, 0, 0], sizes = [1, 1, 256], strides = [1, 1, 1]} : vector<9x1x256xf32> to vector<1x1x256xf32>
    %488 = vector.shape_cast %487 : vector<1x1x256xf32> to vector<1x256xf32>
    %489 = vector.broadcast %488 : vector<1x256xf32> to vector<8x256xf32>
    %490 = arith.mulf %486, %489 : vector<8x256xf32>
    %c241_i32_117 = arith.constant 241 : i32
    %491 = tpu.dynamic_rotate %465 by %c241_i32_117 dim 1 : vector<8x256xf32>, i32 -> vector<8x256xf32>
    %492 = vector.extract_strided_slice %3 {offsets = [6, 0, 0], sizes = [1, 1, 256], strides = [1, 1, 1]} : vector<9x1x256xf32> to vector<1x1x256xf32>
    %493 = vector.shape_cast %492 : vector<1x1x256xf32> to vector<1x256xf32>
    %494 = vector.broadcast %493 : vector<1x256xf32> to vector<8x256xf32>
    %495 = arith.mulf %491, %494 : vector<8x256xf32>
    %c240_i32_118 = arith.constant 240 : i32
    %496 = tpu.dynamic_rotate %465 by %c240_i32_118 dim 1 : vector<8x256xf32>, i32 -> vector<8x256xf32>
    %497 = vector.extract_strided_slice %3 {offsets = [7, 0, 0], sizes = [1, 1, 256], strides = [1, 1, 1]} : vector<9x1x256xf32> to vector<1x1x256xf32>
    %498 = vector.shape_cast %497 : vector<1x1x256xf32> to vector<1x256xf32>
    %499 = vector.broadcast %498 : vector<1x256xf32> to vector<8x256xf32>
    %500 = arith.mulf %496, %499 : vector<8x256xf32>
    %c239_i32_119 = arith.constant 239 : i32
    %501 = tpu.dynamic_rotate %465 by %c239_i32_119 dim 1 : vector<8x256xf32>, i32 -> vector<8x256xf32>
    %502 = vector.extract_strided_slice %3 {offsets = [8, 0, 0], sizes = [1, 1, 256], strides = [1, 1, 1]} : vector<9x1x256xf32> to vector<1x1x256xf32>
    %503 = vector.shape_cast %502 : vector<1x1x256xf32> to vector<1x256xf32>
    %504 = vector.broadcast %503 : vector<1x256xf32> to vector<8x256xf32>
    %505 = arith.mulf %501, %504 : vector<8x256xf32>
    %506 = tpu.concatenate %470, %475, %480, %485, %465, %490, %495, %500, %505 in 0 : vector<8x256xf32>, vector<8x256xf32>, vector<8x256xf32>, vector<8x256xf32>, vector<8x256xf32>, vector<8x256xf32>, vector<8x256xf32>, vector<8x256xf32>, vector<8x256xf32> -> vector<72x256xf32>
    %cst_120 = arith.constant dense<0.000000e+00> : vector<8x256xf32>
    %507 = tpu.matmul %1, %506, %cst_120 {dimension_numbers = #tpu.dot_dimension_numbers<[1], [0], [0], [1], [0, 0, 1, 1], [], []>} : vector<8x72xf32>, vector<72x256xf32>, vector<8x256xf32> -> vector<8x256xf32>
    %508 = vector.broadcast %2 : vector<8x1xf32> to vector<8x256xf32>
    %509 = arith.addf %507, %508 : vector<8x256xf32>
    %c3_i32_121 = arith.constant 3 : i32
    %510 = arith.muli %c3_i32_121, %c7_i32 : i32
    %511 = arith.index_cast %510 : i32 to index
    %512 = memref.load %arg0[%511] : memref<24xf32, #tpu.memory_space<smem>>
    %c3_i32_122 = arith.constant 3 : i32
    %513 = arith.muli %c3_i32_122, %c7_i32 : i32
    %c1_i32_123 = arith.constant 1 : i32
    %514 = arith.addi %513, %c1_i32_123 : i32
    %515 = arith.index_cast %514 : i32 to index
    %516 = memref.load %arg0[%515] : memref<24xf32, #tpu.memory_space<smem>>
    %c3_i32_124 = arith.constant 3 : i32
    %517 = arith.muli %c3_i32_124, %c7_i32 : i32
    %c2_i32_125 = arith.constant 2 : i32
    %518 = arith.addi %517, %c2_i32_125 : i32
    %519 = arith.index_cast %518 : i32 to index
    %520 = memref.load %arg0[%519] : memref<24xf32, #tpu.memory_space<smem>>
    %521 = vector.broadcast %512 : f32 to vector<8x256xf32>
    %522 = arith.mulf %521, %465 : vector<8x256xf32>
    %523 = vector.broadcast %516 : f32 to vector<8x256xf32>
    %524 = arith.mulf %523, %509 : vector<8x256xf32>
    %525 = arith.addf %522, %524 : vector<8x256xf32>
    %526 = arith.index_cast %c7_i32 : i32 to index
    %c0_126 = arith.constant 0 : index
    %c0_127 = arith.constant 0 : index
    %527 = vector.load %arg5[%526, %c0_126, %c0_127] : memref<8x8x256xf32, #tpu.memory_space<vmem>>, vector<1x8x256xf32>
    %528 = vector.shape_cast %527 : vector<1x8x256xf32> to vector<8x256xf32>
    %529 = vector.broadcast %520 : f32 to vector<8x256xf32>
    %530 = arith.mulf %529, %528 : vector<8x256xf32>
    %531 = arith.addf %525, %530 : vector<8x256xf32>
    %c8_i32 = arith.constant 8 : i32
    %c0_128 = arith.constant 0 : index
    %c0_129 = arith.constant 0 : index
    %532 = vector.load %arg6[%c0_128, %c0_129] : memref<8x256xf32, #tpu.memory_space<vmem>>, vector<8x256xf32>
    tpu.vector_store %arg6[%c0_128, %c0_129], %531 {strides = array<i32>} : memref<8x256xf32, #tpu.memory_space<vmem>>, vector<8x256xf32>,
    return
  }
}

</mosaic_0001>

<llo_original>
// kernel: tile.8
$region0: #{tile.8}
  #allocation0 [shape = 's32[1]{0}', space=sflag, size = 0x4, scoped, tag = 'scoped memory for tile.8']
  %s0 = inlined_call_operand.vmem [shape: f32[4], index: 0, kind: input, shape index: {}]
  %s1 = inlined_call_operand.vmem [shape: f32[2,1,1,4], index: 1, kind: output, shape index: {}]
  // Predicated region
  $region2: #{tile.8} parent=0 // pred_check
    _
  $region3: #{tile.8} parent=0 // pred_check_branch
    %3 = sbr.rel (0) target = $region5
  $region4: #{tile.8} parent=0 // pred_region
    _
  $region5: #{tile.8} parent=0 // pred_fallthru
    _
  %v4 = vld [vmem:[%s0] ss:$0 sm:$0xff]
  %5 = vst [vmem:[%s1] sm:$0x3] %v4

// kernel: tile.0
$region0: #{tile.0}
  %s0 = inlined_call_operand.vmem [shape: f32[2,1,1,4], index: 0, kind: input, shape index: {}]
  %s1 = inlined_call_operand.vmem [shape: f32[8,1], index: 1, kind: output, shape index: {}]
  $region1: #{tile.0} parent=0
    #allocation0 [shape = 'u8[4096]{0}', space=vmem, size = 0x1000, scoped, tag = 'scoped mem for input reshape']
    %s3 = ssub.s32 4, 1
    %v4 = vld [vmem:[%s0] sm:%s3]
    %5 = vst [vmem:[#allocation0] sm:%s3] %v4
    %v6 = vld [vmem:[#allocation0] sm:$0x3]
    %vm7 = vcmask 7168
    %8 = vst.msk [vmem:[%s1] ss:$4 sm:$0x3] %vm7, %v6
    %v9 = vld [vmem:[#allocation0] sm:$0x3]
    %10 = vrot.lane.b32.xlu0 %v9, 127
    %v11 = vpop.permute.xlu0 %10
    %vm12 = vcmask 7168
    %s13 = scalar_lea.vmem %s1, 1
    %14 = vst.msk [vmem:[%s13] ss:$4 sm:$0x3] %vm12, %v11
    %v15 = vld [vmem:[#allocation0] sm:$0x3]
    %16 = vrot.lane.b32.xlu0 %v15, 126
    %v17 = vpop.permute.xlu0 %16
    %vm18 = vcmask 7168
    %s19 = scalar_lea.vmem %s1, 2
    %20 = vst.msk [vmem:[%s19] ss:$4 sm:$0x3] %vm18, %v17
    %v21 = vld [vmem:[#allocation0] sm:$0x3]
    %22 = vrot.lane.b32.xlu0 %v21, 125
    %v23 = vpop.permute.xlu0 %22
    %vm24 = vcmask 7168
    %s25 = scalar_lea.vmem %s1, 3
    %26 = vst.msk [vmem:[%s25] ss:$4 sm:$0x3] %vm24, %v23

// kernel: diffusion_sde_forward.1
$region0: #{diffusion_sde_forward.1}
  #allocation0 [shape = 'u32[]', space=smem, size = 0x4, offset = 0x4, fixed_abs, tag = 'smem constant byte address 0x4 - core index']
  #allocation1 [shape = 'u32[72,128]{1,0:T(1,128)}', space=vmem, size = 0x9000, scoped, tag = 'internal scratch']
  %s0 = inlined_call_operand.vmem [shape: f32[24], index: 0, kind: input, shape index: {}]
  %s1 = inlined_call_operand.vmem [shape: f32[8,256], index: 1, kind: input, shape index: {}]
  %s2 = inlined_call_operand.vmem [shape: f32[8,72], index: 2, kind: input, shape index: {}]
  %s3 = inlined_call_operand.vmem [shape: f32[8,1], index: 3, kind: input, shape index: {}]
  %s4 = inlined_call_operand.vmem [shape: f32[9,1,256], index: 4, kind: input, shape index: {}]
  %s5 = inlined_call_operand.vmem [shape: f32[8,8,256], index: 5, kind: input, shape index: {}]
  %s6 = inlined_call_operand.vmem [shape: f32[8,256], index: 6, kind: output, shape index: {}]
  %s7 = sld [smem:[#allocation0]]
  $region38: #{diffusion_sde_forward.1} parent=0
    _
  %s9 = ssub.s32 1, %s7
  %s10 = scalar_select 0, %s9, %s7
  $region1: #{diffusion_sde_forward.1} parent=0
    #allocation2 [shape = 'u8[512]{0}', space=smem, size = 0x200, scoped, tag = 'input window, operand 0, single buffered']
    #allocation3 [shape = 's32[1]{0}', space=sflag, size = 0x4, scoped, tag = 'scoped memory for diffusion_sde_forward.1']
    %11 = vsyncpa [#allocation3], 0
    // Predicated region
    $region2: #{diffusion_sde_forward.1} parent=1 // pred_check
      _
    $region3: #{diffusion_sde_forward.1} parent=1 // pred_check_branch
      %13 = sbr.rel (0) target = $region5
    $region4: #{diffusion_sde_forward.1} parent=1 // pred_region
      %15 = vsyncadd [#allocation3], 0
      %s17 = sshll.u32 %s0, 4
      %s18 = int_to_ptr.vmem [resolvable:$true] %s17
      %20 = dma.vmem_to_smem %s18, 16, [#allocation2], [#allocation3]
    $region5: #{diffusion_sde_forward.1} parent=1 // pred_fallthru
      _
    // Predicated region
    $region6: #{diffusion_sde_forward.1} parent=1 // pred_check
      _
    $region7: #{diffusion_sde_forward.1} parent=1 // pred_check_branch
      %22 = sbr.rel (0) target = $region9
    $region8: #{diffusion_sde_forward.1} parent=1 // pred_region
      _
    $region9: #{diffusion_sde_forward.1} parent=1 // pred_fallthru
      _
    // Predicated region
    $region10: #{diffusion_sde_forward.1} parent=1 // pred_check
      _
    $region11: #{diffusion_sde_forward.1} parent=1 // pred_check_branch
      %24 = sbr.rel (0) target = $region13
    $region12: #{diffusion_sde_forward.1} parent=1 // pred_region
      _
    $region13: #{diffusion_sde_forward.1} parent=1 // pred_fallthru
      _
    // Predicated region
    $region14: #{diffusion_sde_forward.1} parent=1 // pred_check
      _
    $region15: #{diffusion_sde_forward.1} parent=1 // pred_check_branch
      %26 = sbr.rel (0) target = $region17
    $region16: #{diffusion_sde_forward.1} parent=1 // pred_region
      _
    $region17: #{diffusion_sde_forward.1} parent=1 // pred_fallthru
      _
    // Predicated region
    $region18: #{diffusion_sde_forward.1} parent=1 // pred_check
      _
    $region19: #{diffusion_sde_forward.1} parent=1 // pred_check_branch
      %28 = sbr.rel (0) target = $region21
    $region20: #{diffusion_sde_forward.1} parent=1 // pred_region
      _
    $region21: #{diffusion_sde_forward.1} parent=1 // pred_fallthru
      _
    // Predicated region
    $region22: #{diffusion_sde_forward.1} parent=1 // pred_check
      _
    $region23: #{diffusion_sde_forward.1} parent=1 // pred_check_branch
      %30 = sbr.rel (0) target = $region25
    $region24: #{diffusion_sde_forward.1} parent=1 // pred_region
      _
    $region25: #{diffusion_sde_forward.1} parent=1 // pred_fallthru
      _
    // Predicated region
    $region26: #{diffusion_sde_forward.1} parent=1 // pred_check
      _
    $region27: #{diffusion_sde_forward.1} parent=1 // pred_check_branch
      %32 = sbr.rel (0) target = $region29
    $region28: #{diffusion_sde_forward.1} parent=1 // pred_region
      %34 = dma.done [#allocation3], 16
    $region29: #{diffusion_sde_forward.1} parent=1 // pred_fallthru
      _
    %35 = sfence
    %v36 = vld [vmem:[%s1] sm:$0xff]
    %v37 = vld [vmem:[%s1 + $0x8] sm:$0xff]
    %v38 = vld [vmem:[%s2] sm:$0xff]
    %v39 = vld [vmem:[%s3] sm:$0xff]
    %v40 = vld [vmem:[%s4] sm:$0x3]
    %v41 = vld [vmem:[%s4 + $0x2] sm:$0x3]
    %v42 = vld [vmem:[%s4 + $0x4] sm:$0x3]
    %v43 = vld [vmem:[%s4 + $0x6] sm:$0x3]
    %v44 = vld [vmem:[%s4 + $0xa] sm:$0x3]
    %v45 = vld [vmem:[%s4 + $0xc] sm:$0x3]
    %v46 = vld [vmem:[%s4 + $0xe] sm:$0x3]
    %v47 = vld [vmem:[%s4 + $0x10] sm:$0x3]
    %48 = vrot.lane.b32.xlu0 %v36, 17
    %v49 = vpop.permute.xlu0 %48
    %50 = vrot.lane.b32.xlu0 %v37, 17
    %v51 = vpop.permute.xlu0 %50
    %v52 = vlaneseq
    %v53 = vand.u32 %v52, 127
    %vm54 = vcmp.lt.s32.totalorder %v53, 17
    %v55 = vsel %vm54, %v49, %v51
    %v56 = vsel %vm54, %v51, %v49
    %v58 = vperm.slane %v40, 0
    %v59 = vperm.slane %v40, 1
    %v62 = vmul.f32 %v56, %v58
    %v63 = vmul.f32 %v55, %v59
    %64 = vrot.lane.b32.xlu0 %v36, 16
    %v65 = vpop.permute.xlu0 %64
    %66 = vrot.lane.b32.xlu0 %v37, 16
    %v67 = vpop.permute.xlu0 %66
    %vm68 = vcmp.lt.s32.totalorder %v53, 16
    %v69 = vsel %vm68, %v65, %v67
    %v70 = vsel %vm68, %v67, %v65
    %v72 = vperm.slane %v41, 0
    %v73 = vperm.slane %v41, 1
    %v76 = vmul.f32 %v70, %v72
    %v77 = vmul.f32 %v69, %v73
    %78 = vrot.lane.b32.xlu0 %v36, 15
    %v79 = vpop.permute.xlu0 %78
    %80 = vrot.lane.b32.xlu0 %v37, 15
    %v81 = vpop.permute.xlu0 %80
    %vm82 = vcmp.lt.s32.totalorder %v53, 15
    %v83 = vsel %vm82, %v79, %v81
    %v84 = vsel %vm82, %v81, %v79
    %v86 = vperm.slane %v42, 0
    %v87 = vperm.slane %v42, 1
    %v90 = vmul.f32 %v84, %v86
    %v91 = vmul.f32 %v83, %v87
    %92 = vrot.lane.b32.xlu0 %v36, 1
    %v93 = vpop.permute.xlu0 %92
    %94 = vrot.lane.b32.xlu0 %v37, 1
    %v95 = vpop.permute.xlu0 %94
    %vm96 = vcmp.lt.s32.totalorder %v53, 1
    %v97 = vsel %vm96, %v93, %v95
    %v98 = vsel %vm96, %v95, %v93
    %v100 = vperm.slane %v43, 0
    %v101 = vperm.slane %v43, 1
    %v104 = vmul.f32 %v98, %v100
    %v105 = vmul.f32 %v97, %v101
    %106 = vrot.lane.b32.xlu0 %v36, 127
    %v107 = vpop.permute.xlu0 %106
    %108 = vrot.lane.b32.xlu0 %v37, 127
    %v109 = vpop.permute.xlu0 %108
    %vm110 = vcmp.lt.s32.totalorder %v53, 127
    %v111 = vsel %vm110, %v107, %v109
    %v112 = vsel %vm110, %v109, %v107
    %v114 = vperm.slane %v44, 0
    %v115 = vperm.slane %v44, 1
    %v118 = vmul.f32 %v111, %v114
    %v119 = vmul.f32 %v112, %v115
    %120 = vrot.lane.b32.xlu0 %v36, 113
    %v121 = vpop.permute.xlu0 %120
    %122 = vrot.lane.b32.xlu0 %v37, 113
    %v123 = vpop.permute.xlu0 %122
    %vm124 = vcmp.lt.s32.totalorder %v53, 113
    %v125 = vsel %vm124, %v121, %v123
    %v126 = vsel %vm124, %v123, %v121
    %v128 = vperm.slane %v45, 0
    %v129 = vperm.slane %v45, 1
    %v132 = vmul.f32 %v125, %v128
    %v133 = vmul.f32 %v126, %v129
    %134 = vrot.lane.b32.xlu0 %v36, 112
    %v135 = vpop.permute.xlu0 %134
    %136 = vrot.lane.b32.xlu0 %v37, 112
    %v137 = vpop.permute.xlu0 %136
    %vm138 = vcmp.lt.s32.totalorder %v53, 112
    %v139 = vsel %vm138, %v135, %v137
    %v140 = vsel %vm138, %v137, %v135
    %v142 = vperm.slane %v46, 0
    %v143 = vperm.slane %v46, 1
    %v146 = vmul.f32 %v139, %v142
    %v147 = vmul.f32 %v140, %v143
    %148 = vrot.lane.b32.xlu0 %v36, 111
    %v149 = vpop.permute.xlu0 %148
    %150 = vrot.lane.b32.xlu0 %v37, 111
    %v151 = vpop.permute.xlu0 %150
    %vm152 = vcmp.lt.s32.totalorder %v53, 111
    %v153 = vsel %vm152, %v149, %v151
    %v154 = vsel %vm152, %v151, %v149
    %v156 = vperm.slane %v47, 0
    %v157 = vperm.slane %v47, 1
    %v160 = vmul.f32 %v153, %v156
    %v161 = vmul.f32 %v154, %v157
    %163 = vset.pattern.permute.xlu0 0
    %164 = vperm.xlu0 %163, %v39
    %v165 = vpop.permute.xlu0 %164
    %vm167 = vcmask 588800
    %v169 = vsel %vm167, %v38, 0
    %171 = vmatpush.msra.mxu0 0.0
    %172 = vmatpush.msra.mxu0 0.0
    %173 = vmatpush.msra.mxu0 0.0
    %174 = vmatpush.msra.mxu0 0.0
    %175 = vmatpush.msra.mxu0 0.0
    %176 = vmatpush.msra.mxu0 0.0
    %177 = vmatpush.msra.mxu0 0.0
    %178 = vmatpush.msra.mxu0 %v160
    %179 = vmatpush.msra.mxu0 %v146
    %180 = vmatpush.msra.mxu0 %v132
    %181 = vmatpush.msra.mxu0 %v118
    %182 = vmatpush.msra.mxu0 %v36
    %183 = vmatpush.msra.mxu0 %v104
    %184 = vmatpush.msra.mxu0 %v90
    %185 = vmatpush.msra.mxu0 %v76
    %186 = vmatpush.msra.mxu0 %v62
    %187 = vmatmul.f32.gmra.mxu0 %v169
    %v188 = vpop.f32.mrf.mxu0
    %v189 = vadd.f32 %v165, %v188
    %190 = vdwg.mxu0
    %191 = vmatpush.msra.mxu0 0.0
    %192 = vmatpush.msra.mxu0 0.0
    %193 = vmatpush.msra.mxu0 0.0
    %194 = vmatpush.msra.mxu0 0.0
    %195 = vmatpush.msra.mxu0 0.0
    %196 = vmatpush.msra.mxu0 0.0
    %197 = vmatpush.msra.mxu0 0.0
    %198 = vmatpush.msra.mxu0 %v161
    %199 = vmatpush.msra.mxu0 %v147
    %200 = vmatpush.msra.mxu0 %v133
    %201 = vmatpush.msra.mxu0 %v119
    %202 = vmatpush.msra.mxu0 %v37
    %203 = vmatpush.msra.mxu0 %v105
    %204 = vmatpush.msra.mxu0 %v91
    %205 = vmatpush.msra.mxu0 %v77
    %206 = vmatpush.msra.mxu0 %v63
    %207 = vmatmul.f32.gmra.mxu0 %v169
    %v208 = vpop.f32.mrf.mxu0
    %v209 = vadd.f32 %v165, %v208
    %210 = vdwg.mxu0
    %s211 = sld [smem:[#allocation2]]
    %s212 = sld [smem:[#allocation2 + $0x1]]
    %s213 = sld [smem:[#allocation2 + $0x2]]
    %v214 = vstv %s211
    %v215 = vmul.f32 %v214, %v36
    %v216 = vmul.f32 %v214, %v37
    %v217 = vstv %s212
    %v218 = vmul.f32 %v217, %v189
    %v219 = vmul.f32 %v217, %v209
    %v220 = vadd.f32 %v215, %v218
    %v221 = vadd.f32 %v216, %v219
    %v222 = vld [vmem:[%s5] sm:$0xff]
    %v223 = vld [vmem:[%s5 + $0x8] sm:$0xff]
    %v224 = vstv %s213
    %v225 = vmul.f32 %v224, %v222
    %v226 = vmul.f32 %v224, %v223
    %v227 = vadd.f32 %v220, %v225
    %v228 = vadd.f32 %v221, %v226
    %229 = vrot.lane.b32.xlu0 %v227, 17
    %v230 = vpop.permute.xlu0 %229
    %231 = vrot.lane.b32.xlu0 %v228, 17
    %v232 = vpop.permute.xlu0 %231
    %v233 = vsel %vm54, %v230, %v232
    %v234 = vsel %vm54, %v232, %v230
    %v235 = vmul.f32 %v234, %v58
    %v236 = vmul.f32 %v233, %v59
    %237 = vrot.lane.b32.xlu0 %v227, 16
    %v238 = vpop.permute.xlu0 %237
    %239 = vrot.lane.b32.xlu0 %v228, 16
    %v240 = vpop.permute.xlu0 %239
    %v241 = vsel %vm68, %v238, %v240
    %v242 = vsel %vm68, %v240, %v238
    %v243 = vmul.f32 %v242, %v72
    %v244 = vmul.f32 %v241, %v73
    %245 = vrot.lane.b32.xlu0 %v227, 15
    %v246 = vpop.permute.xlu0 %245
    %247 = vrot.lane.b32.xlu0 %v228, 15
    %v248 = vpop.permute.xlu0 %247
    %v249 = vsel %vm82, %v246, %v248
    %v250 = vsel %vm82, %v248, %v246
    %v251 = vmul.f32 %v250, %v86
    %v252 = vmul.f32 %v249, %v87
    %253 = vrot.lane.b32.xlu0 %v227, 1
    %v254 = vpop.permute.xlu0 %253
    %255 = vrot.lane.b32.xlu0 %v228, 1
    %v256 = vpop.permute.xlu0 %255
    %v257 = vsel %vm96, %v254, %v256
    %v258 = vsel %vm96, %v256, %v254
    %v259 = vmul.f32 %v258, %v100
    %v260 = vmul.f32 %v257, %v101
    %261 = vrot.lane.b32.xlu0 %v227, 127
    %v262 = vpop.permute.xlu0 %261
    %263 = vrot.lane.b32.xlu0 %v228, 127
    %v264 = vpop.permute.xlu0 %263
    %v265 = vsel %vm110, %v262, %v264
    %v266 = vsel %vm110, %v264, %v262
    %v267 = vmul.f32 %v265, %v114
    %v268 = vmul.f32 %v266, %v115
    %269 = vrot.lane.b32.xlu0 %v227, 113
    %v270 = vpop.permute.xlu0 %269
    %271 = vrot.lane.b32.xlu0 %v228, 113
    %v272 = vpop.permute.xlu0 %271
    %v273 = vsel %vm124, %v270, %v272
    %v274 = vsel %vm124, %v272, %v270
    %v275 = vmul.f32 %v273, %v128
    %v276 = vmul.f32 %v274, %v129
    %277 = vrot.lane.b32.xlu0 %v227, 112
    %v278 = vpop.permute.xlu0 %277
    %279 = vrot.lane.b32.xlu0 %v228, 112
    %v280 = vpop.permute.xlu0 %279
    %v281 = vsel %vm138, %v278, %v280
    %v282 = vsel %vm138, %v280, %v278
    %v283 = vmul.f32 %v281, %v142
    %v284 = vmul.f32 %v282, %v143
    %285 = vrot.lane.b32.xlu0 %v227, 111
    %v286 = vpop.permute.xlu0 %285
    %287 = vrot.lane.b32.xlu0 %v228, 111
    %v288 = vpop.permute.xlu0 %287
    %v289 = vsel %vm152, %v286, %v288
    %v290 = vsel %vm152, %v288, %v286
    %v291 = vmul.f32 %v289, %v156
    %v292 = vmul.f32 %v290, %v157
    %293 = vmatpush.msra.mxu0 0.0
    %294 = vmatpush.msra.mxu0 0.0
    %295 = vmatpush.msra.mxu0 0.0
    %296 = vmatpush.msra.mxu0 0.0
    %297 = vmatpush.msra.mxu0 0.0
    %298 = vmatpush.msra.mxu0 0.0
    %299 = vmatpush.msra.mxu0 0.0
    %300 = vmatpush.msra.mxu0 %v291
    %301 = vmatpush.msra.mxu0 %v283
    %302 = vmatpush.msra.mxu0 %v275
    %303 = vmatpush.msra.mxu0 %v267
    %304 = vmatpush.msra.mxu0 %v227
    %305 = vmatpush.msra.mxu0 %v259
    %306 = vmatpush.msra.mxu0 %v251
    %307 = vmatpush.msra.mxu0 %v243
    %308 = vmatpush.msra.mxu0 %v235
    %309 = vmatmul.f32.gmra.mxu0 %v169
    %v310 = vpop.f32.mrf.mxu0
    %v311 = vadd.f32 %v165, %v310
    %312 = vdwg.mxu0
    %313 = vmatpush.msra.mxu0 0.0
    %314 = vmatpush.msra.mxu0 0.0
    %315 = vmatpush.msra.mxu0 0.0
    %316 = vmatpush.msra.mxu0 0.0
    %317 = vmatpush.msra.mxu0 0.0
    %318 = vmatpush.msra.mxu0 0.0
    %319 = vmatpush.msra.mxu0 0.0
    %320 = vmatpush.msra.mxu0 %v292
    %321 = vmatpush.msra.mxu0 %v284
    %322 = vmatpush.msra.mxu0 %v276
    %323 = vmatpush.msra.mxu0 %v268
    %324 = vmatpush.msra.mxu0 %v228
    %325 = vmatpush.msra.mxu0 %v260
    %326 = vmatpush.msra.mxu0 %v252
    %327 = vmatpush.msra.mxu0 %v244
    %328 = vmatpush.msra.mxu0 %v236
    %329 = vmatmul.f32.gmra.mxu0 %v169
    %v330 = vpop.f32.mrf.mxu0
    %v331 = vadd.f32 %v165, %v330
    %332 = vdwg.mxu0
    %s333 = sld [smem:[#allocation2 + $0x3]]
    %s334 = sld [smem:[#allocation2 + $0x4]]
    %s335 = sld [smem:[#allocation2 + $0x5]]
    %v336 = vstv %s333
    %v337 = vmul.f32 %v336, %v227
    %v338 = vmul.f32 %v336, %v228
    %v339 = vstv %s334
    %v340 = vmul.f32 %v339, %v311
    %v341 = vmul.f32 %v339, %v331
    %v342 = vadd.f32 %v337, %v340
    %v343 = vadd.f32 %v338, %v341
    %s344 = scalar_lea.vmem %s5, 16
    %v345 = vld [vmem:[%s344] sm:$0xff]
    %v346 = vld [vmem:[%s344 + $0x8] sm:$0xff]
    %v347 = vstv %s335
    %v348 = vmul.f32 %v347, %v345
    %v349 = vmul.f32 %v347, %v346
    %v350 = vadd.f32 %v342, %v348
    %v351 = vadd.f32 %v343, %v349
    %352 = vrot.lane.b32.xlu0 %v350, 17
    %v353 = vpop.permute.xlu0 %352
    %354 = vrot.lane.b32.xlu0 %v351, 17
    %v355 = vpop.permute.xlu0 %354
    %v356 = vsel %vm54, %v353, %v355
    %v357 = vsel %vm54, %v355, %v353
    %v358 = vmul.f32 %v357, %v58
    %v359 = vmul.f32 %v356, %v59
    %360 = vrot.lane.b32.xlu0 %v350, 16
    %v361 = vpop.permute.xlu0 %360
    %362 = vrot.lane.b32.xlu0 %v351, 16
    %v363 = vpop.permute.xlu0 %362
    %v364 = vsel %vm68, %v361, %v363
    %v365 = vsel %vm68, %v363, %v361
    %v366 = vmul.f32 %v365, %v72
    %v367 = vmul.f32 %v364, %v73
    %368 = vrot.lane.b32.xlu0 %v350, 15
    %v369 = vpop.permute.xlu0 %368
    %370 = vrot.lane.b32.xlu0 %v351, 15
    %v371 = vpop.permute.xlu0 %370
    %v372 = vsel %vm82, %v369, %v371
    %v373 = vsel %vm82, %v371, %v369
    %v374 = vmul.f32 %v373, %v86
    %v375 = vmul.f32 %v372, %v87
    %376 = vrot.lane.b32.xlu0 %v350, 1
    %v377 = vpop.permute.xlu0 %376
    %378 = vrot.lane.b32.xlu0 %v351, 1
    %v379 = vpop.permute.xlu0 %378
    %v380 = vsel %vm96, %v377, %v379
    %v381 = vsel %vm96, %v379, %v377
    %v382 = vmul.f32 %v381, %v100
    %v383 = vmul.f32 %v380, %v101
    %384 = vrot.lane.b32.xlu0 %v350, 127
    %v385 = vpop.permute.xlu0 %384
    %386 = vrot.lane.b32.xlu0 %v351, 127
    %v387 = vpop.permute.xlu0 %386
    %v388 = vsel %vm110, %v385, %v387
    %v389 = vsel %vm110, %v387, %v385
    %v390 = vmul.f32 %v388, %v114
    %v391 = vmul.f32 %v389, %v115
    %392 = vrot.lane.b32.xlu0 %v350, 113
    %v393 = vpop.permute.xlu0 %392
    %394 = vrot.lane.b32.xlu0 %v351, 113
    %v395 = vpop.permute.xlu0 %394
    %v396 = vsel %vm124, %v393, %v395
    %v397 = vsel %vm124, %v395, %v393
    %v398 = vmul.f32 %v396, %v128
    %v399 = vmul.f32 %v397, %v129
    %400 = vrot.lane.b32.xlu0 %v350, 112
    %v401 = vpop.permute.xlu0 %400
    %402 = vrot.lane.b32.xlu0 %v351, 112
    %v403 = vpop.permute.xlu0 %402
    %v404 = vsel %vm138, %v401, %v403
    %v405 = vsel %vm138, %v403, %v401
    %v406 = vmul.f32 %v404, %v142
    %v407 = vmul.f32 %v405, %v143
    %408 = vrot.lane.b32.xlu0 %v350, 111
    %v409 = vpop.permute.xlu0 %408
    %410 = vrot.lane.b32.xlu0 %v351, 111
    %v411 = vpop.permute.xlu0 %410
    %v412 = vsel %vm152, %v409, %v411
    %v413 = vsel %vm152, %v411, %v409
    %v414 = vmul.f32 %v412, %v156
    %v415 = vmul.f32 %v413, %v157
    %416 = vmatpush.msra.mxu0 0.0
    %417 = vmatpush.msra.mxu0 0.0
    %418 = vmatpush.msra.mxu0 0.0
    %419 = vmatpush.msra.mxu0 0.0
    %420 = vmatpush.msra.mxu0 0.0
    %421 = vmatpush.msra.mxu0 0.0
    %422 = vmatpush.msra.mxu0 0.0
    %423 = vmatpush.msra.mxu0 %v414
    %424 = vmatpush.msra.mxu0 %v406
    %425 = vmatpush.msra.mxu0 %v398
    %426 = vmatpush.msra.mxu0 %v390
    %427 = vmatpush.msra.mxu0 %v350
    %428 = vmatpush.msra.mxu0 %v382
    %429 = vmatpush.msra.mxu0 %v374
    %430 = vmatpush.msra.mxu0 %v366
    %431 = vmatpush.msra.mxu0 %v358
    %432 = vmatmul.f32.gmra.mxu0 %v169
    %v433 = vpop.f32.mrf.mxu0
    %v434 = vadd.f32 %v165, %v433
    %435 = vdwg.mxu0
    %436 = vmatpush.msra.mxu0 0.0
    %437 = vmatpush.msra.mxu0 0.0
    %438 = vmatpush.msra.mxu0 0.0
    %439 = vmatpush.msra.mxu0 0.0
    %440 = vmatpush.msra.mxu0 0.0
    %441 = vmatpush.msra.mxu0 0.0
    %442 = vmatpush.msra.mxu0 0.0
    %443 = vmatpush.msra.mxu0 %v415
    %444 = vmatpush.msra.mxu0 %v407
    %445 = vmatpush.msra.mxu0 %v399
    %446 = vmatpush.msra.mxu0 %v391
    %447 = vmatpush.msra.mxu0 %v351
    %448 = vmatpush.msra.mxu0 %v383
    %449 = vmatpush.msra.mxu0 %v375
    %450 = vmatpush.msra.mxu0 %v367
    %451 = vmatpush.msra.mxu0 %v359
    %452 = vmatmul.f32.gmra.mxu0 %v169
    %v453 = vpop.f32.mrf.mxu0
    %v454 = vadd.f32 %v165, %v453
    %455 = vdwg.mxu0
    %s456 = sld [smem:[#allocation2 + $0x6]]
    %s457 = sld [smem:[#allocation2 + $0x7]]
    %s458 = sld [smem:[#allocation2 + $0x8]]
    %v459 = vstv %s456
    %v460 = vmul.f32 %v459, %v350
    %v461 = vmul.f32 %v459, %v351
    %v462 = vstv %s457
    %v463 = vmul.f32 %v462, %v434
    %v464 = vmul.f32 %v462, %v454
    %v465 = vadd.f32 %v460, %v463
    %v466 = vadd.f32 %v461, %v464
    %s467 = scalar_lea.vmem %s5, 32
    %v468 = vld [vmem:[%s467] sm:$0xff]
    %v469 = vld [vmem:[%s467 + $0x8] sm:$0xff]
    %v470 = vstv %s458
    %v471 = vmul.f32 %v470, %v468
    %v472 = vmul.f32 %v470, %v469
    %v473 = vadd.f32 %v465, %v471
    %v474 = vadd.f32 %v466, %v472
    %475 = vrot.lane.b32.xlu0 %v473, 17
    %v476 = vpop.permute.xlu0 %475
    %477 = vrot.lane.b32.xlu0 %v474, 17
    %v478 = vpop.permute.xlu0 %477
    %v479 = vsel %vm54, %v476, %v478
    %v480 = vsel %vm54, %v478, %v476
    %v481 = vmul.f32 %v480, %v58
    %v482 = vmul.f32 %v479, %v59
    %483 = vrot.lane.b32.xlu0 %v473, 16
    %v484 = vpop.permute.xlu0 %483
    %485 = vrot.lane.b32.xlu0 %v474, 16
    %v486 = vpop.permute.xlu0 %485
    %v487 = vsel %vm68, %v484, %v486
    %v488 = vsel %vm68, %v486, %v484
    %v489 = vmul.f32 %v488, %v72
    %v490 = vmul.f32 %v487, %v73
    %491 = vrot.lane.b32.xlu0 %v473, 15
    %v492 = vpop.permute.xlu0 %491
    %493 = vrot.lane.b32.xlu0 %v474, 15
    %v494 = vpop.permute.xlu0 %493
    %v495 = vsel %vm82, %v492, %v494
    %v496 = vsel %vm82, %v494, %v492
    %v497 = vmul.f32 %v496, %v86
    %v498 = vmul.f32 %v495, %v87
    %499 = vrot.lane.b32.xlu0 %v473, 1
    %v500 = vpop.permute.xlu0 %499
    %501 = vrot.lane.b32.xlu0 %v474, 1
    %v502 = vpop.permute.xlu0 %501
    %v503 = vsel %vm96, %v500, %v502
    %v504 = vsel %vm96, %v502, %v500
    %v505 = vmul.f32 %v504, %v100
    %v506 = vmul.f32 %v503, %v101
    %507 = vrot.lane.b32.xlu0 %v473, 127
    %v508 = vpop.permute.xlu0 %507
    %509 = vrot.lane.b32.xlu0 %v474, 127
    %v510 = vpop.permute.xlu0 %509
    %v511 = vsel %vm110, %v508, %v510
    %v512 = vsel %vm110, %v510, %v508
    %v513 = vmul.f32 %v511, %v114
    %v514 = vmul.f32 %v512, %v115
    %515 = vrot.lane.b32.xlu0 %v473, 113
    %v516 = vpop.permute.xlu0 %515
    %517 = vrot.lane.b32.xlu0 %v474, 113
    %v518 = vpop.permute.xlu0 %517
    %v519 = vsel %vm124, %v516, %v518
    %v520 = vsel %vm124, %v518, %v516
    %v521 = vmul.f32 %v519, %v128
    %v522 = vmul.f32 %v520, %v129
    %523 = vrot.lane.b32.xlu0 %v473, 112
    %v524 = vpop.permute.xlu0 %523
    %525 = vrot.lane.b32.xlu0 %v474, 112
    %v526 = vpop.permute.xlu0 %525
    %v527 = vsel %vm138, %v524, %v526
    %v528 = vsel %vm138, %v526, %v524
    %v529 = vmul.f32 %v527, %v142
    %v530 = vmul.f32 %v528, %v143
    %531 = vrot.lane.b32.xlu0 %v473, 111
    %v532 = vpop.permute.xlu0 %531
    %533 = vrot.lane.b32.xlu0 %v474, 111
    %v534 = vpop.permute.xlu0 %533
    %v535 = vsel %vm152, %v532, %v534
    %v536 = vsel %vm152, %v534, %v532
    %v537 = vmul.f32 %v535, %v156
    %v538 = vmul.f32 %v536, %v157
    %539 = vmatpush.msra.mxu0 0.0
    %540 = vmatpush.msra.mxu0 0.0
    %541 = vmatpush.msra.mxu0 0.0
    %542 = vmatpush.msra.mxu0 0.0
    %543 = vmatpush.msra.mxu0 0.0
    %544 = vmatpush.msra.mxu0 0.0
    %545 = vmatpush.msra.mxu0 0.0
    %546 = vmatpush.msra.mxu0 %v537
    %547 = vmatpush.msra.mxu0 %v529
    %548 = vmatpush.msra.mxu0 %v521
    %549 = vmatpush.msra.mxu0 %v513
    %550 = vmatpush.msra.mxu0 %v473
    %551 = vmatpush.msra.mxu0 %v505
    %552 = vmatpush.msra.mxu0 %v497
    %553 = vmatpush.msra.mxu0 %v489
    %554 = vmatpush.msra.mxu0 %v481
    %555 = vmatmul.f32.gmra.mxu0 %v169
    %v556 = vpop.f32.mrf.mxu0
    %v557 = vadd.f32 %v165, %v556
    %558 = vdwg.mxu0
    %559 = vmatpush.msra.mxu0 0.0
    %560 = vmatpush.msra.mxu0 0.0
    %561 = vmatpush.msra.mxu0 0.0
    %562 = vmatpush.msra.mxu0 0.0
    %563 = vmatpush.msra.mxu0 0.0
    %564 = vmatpush.msra.mxu0 0.0
    %565 = vmatpush.msra.mxu0 0.0
    %566 = vmatpush.msra.mxu0 %v538
    %567 = vmatpush.msra.mxu0 %v530
    %568 = vmatpush.msra.mxu0 %v522
    %569 = vmatpush.msra.mxu0 %v514
    %570 = vmatpush.msra.mxu0 %v474
    %571 = vmatpush.msra.mxu0 %v506
    %572 = vmatpush.msra.mxu0 %v498
    %573 = vmatpush.msra.mxu0 %v490
    %574 = vmatpush.msra.mxu0 %v482
    %575 = vmatmul.f32.gmra.mxu0 %v169
    %v576 = vpop.f32.mrf.mxu0
    %v577 = vadd.f32 %v165, %v576
    %578 = vdwg.mxu0
    %s579 = sld [smem:[#allocation2 + $0x9]]
    %s580 = sld [smem:[#allocation2 + $0xa]]
    %s581 = sld [smem:[#allocation2 + $0xb]]
    %v582 = vstv %s579
    %v583 = vmul.f32 %v582, %v473
    %v584 = vmul.f32 %v582, %v474
    %v585 = vstv %s580
    %v586 = vmul.f32 %v585, %v557
    %v587 = vmul.f32 %v585, %v577
    %v588 = vadd.f32 %v583, %v586
    %v589 = vadd.f32 %v584, %v587
    %s590 = scalar_lea.vmem %s5, 48
    %v591 = vld [vmem:[%s590] sm:$0xff]
    %v592 = vld [vmem:[%s590 + $0x8] sm:$0xff]
    %v593 = vstv %s581
    %v594 = vmul.f32 %v593, %v591
    %v595 = vmul.f32 %v593, %v592
    %v596 = vadd.f32 %v588, %v594
    %v597 = vadd.f32 %v589, %v595
    %598 = vrot.lane.b32.xlu0 %v596, 17
    %v599 = vpop.permute.xlu0 %598
    %600 = vrot.lane.b32.xlu0 %v597, 17
    %v601 = vpop.permute.xlu0 %600
    %v602 = vsel %vm54, %v599, %v601
    %v603 = vsel %vm54, %v601, %v599
    %v604 = vmul.f32 %v603, %v58
    %v605 = vmul.f32 %v602, %v59
    %606 = vrot.lane.b32.xlu0 %v596, 16
    %v607 = vpop.permute.xlu0 %606
    %608 = vrot.lane.b32.xlu0 %v597, 16
    %v609 = vpop.permute.xlu0 %608
    %v610 = vsel %vm68, %v607, %v609
    %v611 = vsel %vm68, %v609, %v607
    %v612 = vmul.f32 %v611, %v72
    %v613 = vmul.f32 %v610, %v73
    %614 = vrot.lane.b32.xlu0 %v596, 15
    %v615 = vpop.permute.xlu0 %614
    %616 = vrot.lane.b32.xlu0 %v597, 15
    %v617 = vpop.permute.xlu0 %616
    %v618 = vsel %vm82, %v615, %v617
    %v619 = vsel %vm82, %v617, %v615
    %v620 = vmul.f32 %v619, %v86
    %v621 = vmul.f32 %v618, %v87
    %622 = vrot.lane.b32.xlu0 %v596, 1
    %v623 = vpop.permute.xlu0 %622
    %624 = vrot.lane.b32.xlu0 %v597, 1
    %v625 = vpop.permute.xlu0 %624
    %v626 = vsel %vm96, %v623, %v625
    %v627 = vsel %vm96, %v625, %v623
    %v628 = vmul.f32 %v627, %v100
    %v629 = vmul.f32 %v626, %v101
    %630 = vrot.lane.b32.xlu0 %v596, 127
    %v631 = vpop.permute.xlu0 %630
    %632 = vrot.lane.b32.xlu0 %v597, 127
    %v633 = vpop.permute.xlu0 %632
    %v634 = vsel %vm110, %v631, %v633
    %v635 = vsel %vm110, %v633, %v631
    %v636 = vmul.f32 %v634, %v114
    %v637 = vmul.f32 %v635, %v115
    %638 = vrot.lane.b32.xlu0 %v596, 113
    %v639 = vpop.permute.xlu0 %638
    %640 = vrot.lane.b32.xlu0 %v597, 113
    %v641 = vpop.permute.xlu0 %640
    %v642 = vsel %vm124, %v639, %v641
    %v643 = vsel %vm124, %v641, %v639
    %v644 = vmul.f32 %v642, %v128
    %v645 = vmul.f32 %v643, %v129
    %646 = vrot.lane.b32.xlu0 %v596, 112
    %v647 = vpop.permute.xlu0 %646
    %648 = vrot.lane.b32.xlu0 %v597, 112
    %v649 = vpop.permute.xlu0 %648
    %v650 = vsel %vm138, %v647, %v649
    %v651 = vsel %vm138, %v649, %v647
    %v652 = vmul.f32 %v650, %v142
    %v653 = vmul.f32 %v651, %v143
    %654 = vrot.lane.b32.xlu0 %v596, 111
    %v655 = vpop.permute.xlu0 %654
    %656 = vrot.lane.b32.xlu0 %v597, 111
    %v657 = vpop.permute.xlu0 %656
    %v658 = vsel %vm152, %v655, %v657
    %v659 = vsel %vm152, %v657, %v655
    %v660 = vmul.f32 %v658, %v156
    %v661 = vmul.f32 %v659, %v157
    %662 = vmatpush.msra.mxu0 0.0
    %663 = vmatpush.msra.mxu0 0.0
    %664 = vmatpush.msra.mxu0 0.0
    %665 = vmatpush.msra.mxu0 0.0
    %666 = vmatpush.msra.mxu0 0.0
    %667 = vmatpush.msra.mxu0 0.0
    %668 = vmatpush.msra.mxu0 0.0
    %669 = vmatpush.msra.mxu0 %v660
    %670 = vmatpush.msra.mxu0 %v652
    %671 = vmatpush.msra.mxu0 %v644
    %672 = vmatpush.msra.mxu0 %v636
    %673 = vmatpush.msra.mxu0 %v596
    %674 = vmatpush.msra.mxu0 %v628
    %675 = vmatpush.msra.mxu0 %v620
    %676 = vmatpush.msra.mxu0 %v612
    %677 = vmatpush.msra.mxu0 %v604
    %678 = vmatmul.f32.gmra.mxu0 %v169
    %v679 = vpop.f32.mrf.mxu0
    %v680 = vadd.f32 %v165, %v679
    %681 = vdwg.mxu0
    %682 = vmatpush.msra.mxu0 0.0
    %683 = vmatpush.msra.mxu0 0.0
    %684 = vmatpush.msra.mxu0 0.0
    %685 = vmatpush.msra.mxu0 0.0
    %686 = vmatpush.msra.mxu0 0.0
    %687 = vmatpush.msra.mxu0 0.0
    %688 = vmatpush.msra.mxu0 0.0
    %689 = vmatpush.msra.mxu0 %v661
    %690 = vmatpush.msra.mxu0 %v653
    %691 = vmatpush.msra.mxu0 %v645
    %692 = vmatpush.msra.mxu0 %v637
    %693 = vmatpush.msra.mxu0 %v597
    %694 = vmatpush.msra.mxu0 %v629
    %695 = vmatpush.msra.mxu0 %v621
    %696 = vmatpush.msra.mxu0 %v613
    %697 = vmatpush.msra.mxu0 %v605
    %698 = vmatmul.f32.gmra.mxu0 %v169
    %v699 = vpop.f32.mrf.mxu0
    %v700 = vadd.f32 %v165, %v699
    %701 = vdwg.mxu0
    %s702 = sld [smem:[#allocation2 + $0xc]]
    %s703 = sld [smem:[#allocation2 + $0xd]]
    %s704 = sld [smem:[#allocation2 + $0xe]]
    %v705 = vstv %s702
    %v706 = vmul.f32 %v705, %v596
    %v707 = vmul.f32 %v705, %v597
    %v708 = vstv %s703
    %v709 = vmul.f32 %v708, %v680
    %v710 = vmul.f32 %v708, %v700
    %v711 = vadd.f32 %v706, %v709
    %v712 = vadd.f32 %v707, %v710
    %s713 = scalar_lea.vmem %s5, 64
    %v714 = vld [vmem:[%s713] sm:$0xff]
    %v715 = vld [vmem:[%s713 + $0x8] sm:$0xff]
    %v716 = vstv %s704
    %v717 = vmul.f32 %v716, %v714
    %v718 = vmul.f32 %v716, %v715
    %v719 = vadd.f32 %v711, %v717
    %v720 = vadd.f32 %v712, %v718
    %721 = vrot.lane.b32.xlu0 %v719, 17
    %v722 = vpop.permute.xlu0 %721
    %723 = vrot.lane.b32.xlu0 %v720, 17
    %v724 = vpop.permute.xlu0 %723
    %v725 = vsel %vm54, %v722, %v724
    %v726 = vsel %vm54, %v724, %v722
    %v727 = vmul.f32 %v726, %v58
    %v728 = vmul.f32 %v725, %v59
    %729 = vrot.lane.b32.xlu0 %v719, 16
    %v730 = vpop.permute.xlu0 %729
    %731 = vrot.lane.b32.xlu0 %v720, 16
    %v732 = vpop.permute.xlu0 %731
    %v733 = vsel %vm68, %v730, %v732
    %v734 = vsel %vm68, %v732, %v730
    %v735 = vmul.f32 %v734, %v72
    %v736 = vmul.f32 %v733, %v73
    %737 = vrot.lane.b32.xlu0 %v719, 15
    %v738 = vpop.permute.xlu0 %737
    %739 = vrot.lane.b32.xlu0 %v720, 15
    %v740 = vpop.permute.xlu0 %739
    %v741 = vsel %vm82, %v738, %v740
    %v742 = vsel %vm82, %v740, %v738
    %v743 = vmul.f32 %v742, %v86
    %v744 = vmul.f32 %v741, %v87
    %745 = vrot.lane.b32.xlu0 %v719, 1
    %v746 = vpop.permute.xlu0 %745
    %747 = vrot.lane.b32.xlu0 %v720, 1
    %v748 = vpop.permute.xlu0 %747
    %v749 = vsel %vm96, %v746, %v748
    %v750 = vsel %vm96, %v748, %v746
    %v751 = vmul.f32 %v750, %v100
    %v752 = vmul.f32 %v749, %v101
    %753 = vrot.lane.b32.xlu0 %v719, 127
    %v754 = vpop.permute.xlu0 %753
    %755 = vrot.lane.b32.xlu0 %v720, 127
    %v756 = vpop.permute.xlu0 %755
    %v757 = vsel %vm110, %v754, %v756
    %v758 = vsel %vm110, %v756, %v754
    %v759 = vmul.f32 %v757, %v114
    %v760 = vmul.f32 %v758, %v115
    %761 = vrot.lane.b32.xlu0 %v719, 113
    %v762 = vpop.permute.xlu0 %761
    %763 = vrot.lane.b32.xlu0 %v720, 113
    %v764 = vpop.permute.xlu0 %763
    %v765 = vsel %vm124, %v762, %v764
    %v766 = vsel %vm124, %v764, %v762
    %v767 = vmul.f32 %v765, %v128
    %v768 = vmul.f32 %v766, %v129
    %769 = vrot.lane.b32.xlu0 %v719, 112
    %v770 = vpop.permute.xlu0 %769
    %771 = vrot.lane.b32.xlu0 %v720, 112
    %v772 = vpop.permute.xlu0 %771
    %v773 = vsel %vm138, %v770, %v772
    %v774 = vsel %vm138, %v772, %v770
    %v775 = vmul.f32 %v773, %v142
    %v776 = vmul.f32 %v774, %v143
    %777 = vrot.lane.b32.xlu0 %v719, 111
    %v778 = vpop.permute.xlu0 %777
    %779 = vrot.lane.b32.xlu0 %v720, 111
    %v780 = vpop.permute.xlu0 %779
    %v781 = vsel %vm152, %v778, %v780
    %v782 = vsel %vm152, %v780, %v778
    %v783 = vmul.f32 %v781, %v156
    %v784 = vmul.f32 %v782, %v157
    %785 = vmatpush.msra.mxu0 0.0
    %786 = vmatpush.msra.mxu0 0.0
    %787 = vmatpush.msra.mxu0 0.0
    %788 = vmatpush.msra.mxu0 0.0
    %789 = vmatpush.msra.mxu0 0.0
    %790 = vmatpush.msra.mxu0 0.0
    %791 = vmatpush.msra.mxu0 0.0
    %792 = vmatpush.msra.mxu0 %v783
    %793 = vmatpush.msra.mxu0 %v775
    %794 = vmatpush.msra.mxu0 %v767
    %795 = vmatpush.msra.mxu0 %v759
    %796 = vmatpush.msra.mxu0 %v719
    %797 = vmatpush.msra.mxu0 %v751
    %798 = vmatpush.msra.mxu0 %v743
    %799 = vmatpush.msra.mxu0 %v735
    %800 = vmatpush.msra.mxu0 %v727
    %801 = vmatmul.f32.gmra.mxu0 %v169
    %v802 = vpop.f32.mrf.mxu0
    %v803 = vadd.f32 %v165, %v802
    %804 = vdwg.mxu0
    %805 = vmatpush.msra.mxu0 0.0
    %806 = vmatpush.msra.mxu0 0.0
    %807 = vmatpush.msra.mxu0 0.0
    %808 = vmatpush.msra.mxu0 0.0
    %809 = vmatpush.msra.mxu0 0.0
    %810 = vmatpush.msra.mxu0 0.0
    %811 = vmatpush.msra.mxu0 0.0
    %812 = vmatpush.msra.mxu0 %v784
    %813 = vmatpush.msra.mxu0 %v776
    %814 = vmatpush.msra.mxu0 %v768
    %815 = vmatpush.msra.mxu0 %v760
    %816 = vmatpush.msra.mxu0 %v720
    %817 = vmatpush.msra.mxu0 %v752
    %818 = vmatpush.msra.mxu0 %v744
    %819 = vmatpush.msra.mxu0 %v736
    %820 = vmatpush.msra.mxu0 %v728
    %821 = vmatmul.f32.gmra.mxu0 %v169
    %v822 = vpop.f32.mrf.mxu0
    %v823 = vadd.f32 %v165, %v822
    %824 = vdwg.mxu0
    %s825 = sld [smem:[#allocation2 + $0xf]]
    %s826 = sld [smem:[#allocation2 + $0x10]]
    %s827 = sld [smem:[#allocation2 + $0x11]]
    %v828 = vstv %s825
    %v829 = vmul.f32 %v828, %v719
    %v830 = vmul.f32 %v828, %v720
    %v831 = vstv %s826
    %v832 = vmul.f32 %v831, %v803
    %v833 = vmul.f32 %v831, %v823
    %v834 = vadd.f32 %v829, %v832
    %v835 = vadd.f32 %v830, %v833
    %s836 = scalar_lea.vmem %s5, 80
    %v837 = vld [vmem:[%s836] sm:$0xff]
    %v838 = vld [vmem:[%s836 + $0x8] sm:$0xff]
    %v839 = vstv %s827
    %v840 = vmul.f32 %v839, %v837
    %v841 = vmul.f32 %v839, %v838
    %v842 = vadd.f32 %v834, %v840
    %v843 = vadd.f32 %v835, %v841
    %844 = vrot.lane.b32.xlu0 %v842, 17
    %v845 = vpop.permute.xlu0 %844
    %846 = vrot.lane.b32.xlu0 %v843, 17
    %v847 = vpop.permute.xlu0 %846
    %v848 = vsel %vm54, %v845, %v847
    %v849 = vsel %vm54, %v847, %v845
    %v850 = vmul.f32 %v849, %v58
    %v851 = vmul.f32 %v848, %v59
    %852 = vrot.lane.b32.xlu0 %v842, 16
    %v853 = vpop.permute.xlu0 %852
    %854 = vrot.lane.b32.xlu0 %v843, 16
    %v855 = vpop.permute.xlu0 %854
    %v856 = vsel %vm68, %v853, %v855
    %v857 = vsel %vm68, %v855, %v853
    %v858 = vmul.f32 %v857, %v72
    %v859 = vmul.f32 %v856, %v73
    %860 = vrot.lane.b32.xlu0 %v842, 15
    %v861 = vpop.permute.xlu0 %860
    %862 = vrot.lane.b32.xlu0 %v843, 15
    %v863 = vpop.permute.xlu0 %862
    %v864 = vsel %vm82, %v861, %v863
    %v865 = vsel %vm82, %v863, %v861
    %v866 = vmul.f32 %v865, %v86
    %v867 = vmul.f32 %v864, %v87
    %868 = vrot.lane.b32.xlu0 %v842, 1
    %v869 = vpop.permute.xlu0 %868
    %870 = vrot.lane.b32.xlu0 %v843, 1
    %v871 = vpop.permute.xlu0 %870
    %v872 = vsel %vm96, %v869, %v871
    %v873 = vsel %vm96, %v871, %v869
    %v874 = vmul.f32 %v873, %v100
    %v875 = vmul.f32 %v872, %v101
    %876 = vrot.lane.b32.xlu0 %v842, 127
    %v877 = vpop.permute.xlu0 %876
    %878 = vrot.lane.b32.xlu0 %v843, 127
    %v879 = vpop.permute.xlu0 %878
    %v880 = vsel %vm110, %v877, %v879
    %v881 = vsel %vm110, %v879, %v877
    %v882 = vmul.f32 %v880, %v114
    %v883 = vmul.f32 %v881, %v115
    %884 = vrot.lane.b32.xlu0 %v842, 113
    %v885 = vpop.permute.xlu0 %884
    %886 = vrot.lane.b32.xlu0 %v843, 113
    %v887 = vpop.permute.xlu0 %886
    %v888 = vsel %vm124, %v885, %v887
    %v889 = vsel %vm124, %v887, %v885
    %v890 = vmul.f32 %v888, %v128
    %v891 = vmul.f32 %v889, %v129
    %892 = vrot.lane.b32.xlu0 %v842, 112
    %v893 = vpop.permute.xlu0 %892
    %894 = vrot.lane.b32.xlu0 %v843, 112
    %v895 = vpop.permute.xlu0 %894
    %v896 = vsel %vm138, %v893, %v895
    %v897 = vsel %vm138, %v895, %v893
    %v898 = vmul.f32 %v896, %v142
    %v899 = vmul.f32 %v897, %v143
    %900 = vrot.lane.b32.xlu0 %v842, 111
    %v901 = vpop.permute.xlu0 %900
    %902 = vrot.lane.b32.xlu0 %v843, 111
    %v903 = vpop.permute.xlu0 %902
    %v904 = vsel %vm152, %v901, %v903
    %v905 = vsel %vm152, %v903, %v901
    %v906 = vmul.f32 %v904, %v156
    %v907 = vmul.f32 %v905, %v157
    %908 = vmatpush.msra.mxu0 0.0
    %909 = vmatpush.msra.mxu0 0.0
    %910 = vmatpush.msra.mxu0 0.0
    %911 = vmatpush.msra.mxu0 0.0
    %912 = vmatpush.msra.mxu0 0.0
    %913 = vmatpush.msra.mxu0 0.0
    %914 = vmatpush.msra.mxu0 0.0
    %915 = vmatpush.msra.mxu0 %v906
    %916 = vmatpush.msra.mxu0 %v898
    %917 = vmatpush.msra.mxu0 %v890
    %918 = vmatpush.msra.mxu0 %v882
    %919 = vmatpush.msra.mxu0 %v842
    %920 = vmatpush.msra.mxu0 %v874
    %921 = vmatpush.msra.mxu0 %v866
    %922 = vmatpush.msra.mxu0 %v858
    %923 = vmatpush.msra.mxu0 %v850
    %924 = vmatmul.f32.gmra.mxu0 %v169
    %v925 = vpop.f32.mrf.mxu0
    %v926 = vadd.f32 %v165, %v925
    %927 = vdwg.mxu0
    %928 = vmatpush.msra.mxu0 0.0
    %929 = vmatpush.msra.mxu0 0.0
    %930 = vmatpush.msra.mxu0 0.0
    %931 = vmatpush.msra.mxu0 0.0
    %932 = vmatpush.msra.mxu0 0.0
    %933 = vmatpush.msra.mxu0 0.0
    %934 = vmatpush.msra.mxu0 0.0
    %935 = vmatpush.msra.mxu0 %v907
    %936 = vmatpush.msra.mxu0 %v899
    %937 = vmatpush.msra.mxu0 %v891
    %938 = vmatpush.msra.mxu0 %v883
    %939 = vmatpush.msra.mxu0 %v843
    %940 = vmatpush.msra.mxu0 %v875
    %941 = vmatpush.msra.mxu0 %v867
    %942 = vmatpush.msra.mxu0 %v859
    %943 = vmatpush.msra.mxu0 %v851
    %944 = vmatmul.f32.gmra.mxu0 %v169
    %v945 = vpop.f32.mrf.mxu0
    %v946 = vadd.f32 %v165, %v945
    %947 = vdwg.mxu0
    %s948 = sld [smem:[#allocation2 + $0x12]]
    %s949 = sld [smem:[#allocation2 + $0x13]]
    %s950 = sld [smem:[#allocation2 + $0x14]]
    %v951 = vstv %s948
    %v952 = vmul.f32 %v951, %v842
    %v953 = vmul.f32 %v951, %v843
    %v954 = vstv %s949
    %v955 = vmul.f32 %v954, %v926
    %v956 = vmul.f32 %v954, %v946
    %v957 = vadd.f32 %v952, %v955
    %v958 = vadd.f32 %v953, %v956
    %s959 = scalar_lea.vmem %s5, 96
    %v960 = vld [vmem:[%s959] sm:$0xff]
    %v961 = vld [vmem:[%s959 + $0x8] sm:$0xff]
    %v962 = vstv %s950
    %v963 = vmul.f32 %v962, %v960
    %v964 = vmul.f32 %v962, %v961
    %v965 = vadd.f32 %v957, %v963
    %v966 = vadd.f32 %v958, %v964
    %967 = vrot.lane.b32.xlu0 %v965, 17
    %v968 = vpop.permute.xlu0 %967
    %969 = vrot.lane.b32.xlu0 %v966, 17
    %v970 = vpop.permute.xlu0 %969
    %v971 = vsel %vm54, %v968, %v970
    %v972 = vsel %vm54, %v970, %v968
    %v973 = vmul.f32 %v972, %v58
    %v974 = vmul.f32 %v971, %v59
    %975 = vrot.lane.b32.xlu0 %v965, 16
    %v976 = vpop.permute.xlu0 %975
    %977 = vrot.lane.b32.xlu0 %v966, 16
    %v978 = vpop.permute.xlu0 %977
    %v979 = vsel %vm68, %v976, %v978
    %v980 = vsel %vm68, %v978, %v976
    %v981 = vmul.f32 %v980, %v72
    %v982 = vmul.f32 %v979, %v73
    %983 = vrot.lane.b32.xlu0 %v965, 15
    %v984 = vpop.permute.xlu0 %983
    %985 = vrot.lane.b32.xlu0 %v966, 15
    %v986 = vpop.permute.xlu0 %985
    %v987 = vsel %vm82, %v984, %v986
    %v988 = vsel %vm82, %v986, %v984
    %v989 = vmul.f32 %v988, %v86
    %v990 = vmul.f32 %v987, %v87
    %991 = vrot.lane.b32.xlu0 %v965, 1
    %v992 = vpop.permute.xlu0 %991
    %993 = vrot.lane.b32.xlu0 %v966, 1
    %v994 = vpop.permute.xlu0 %993
    %v995 = vsel %vm96, %v992, %v994
    %v996 = vsel %vm96, %v994, %v992
    %v997 = vmul.f32 %v996, %v100
    %v998 = vmul.f32 %v995, %v101
    %999 = vrot.lane.b32.xlu0 %v965, 127
    %v1000 = vpop.permute.xlu0 %999
    %1001 = vrot.lane.b32.xlu0 %v966, 127
    %v1002 = vpop.permute.xlu0 %1001
    %v1003 = vsel %vm110, %v1000, %v1002
    %v1004 = vsel %vm110, %v1002, %v1000
    %v1005 = vmul.f32 %v1003, %v114
    %v1006 = vmul.f32 %v1004, %v115
    %1007 = vrot.lane.b32.xlu0 %v965, 113
    %v1008 = vpop.permute.xlu0 %1007
    %1009 = vrot.lane.b32.xlu0 %v966, 113
    %v1010 = vpop.permute.xlu0 %1009
    %v1011 = vsel %vm124, %v1008, %v1010
    %v1012 = vsel %vm124, %v1010, %v1008
    %v1013 = vmul.f32 %v1011, %v128
    %v1014 = vmul.f32 %v1012, %v129
    %1015 = vrot.lane.b32.xlu0 %v965, 112
    %v1016 = vpop.permute.xlu0 %1015
    %1017 = vrot.lane.b32.xlu0 %v966, 112
    %v1018 = vpop.permute.xlu0 %1017
    %v1019 = vsel %vm138, %v1016, %v1018
    %v1020 = vsel %vm138, %v1018, %v1016
    %v1021 = vmul.f32 %v1019, %v142
    %v1022 = vmul.f32 %v1020, %v143
    %1023 = vrot.lane.b32.xlu0 %v965, 111
    %v1024 = vpop.permute.xlu0 %1023
    %1025 = vrot.lane.b32.xlu0 %v966, 111
    %v1026 = vpop.permute.xlu0 %1025
    %v1027 = vsel %vm152, %v1024, %v1026
    %v1028 = vsel %vm152, %v1026, %v1024
    %v1029 = vmul.f32 %v1027, %v156
    %v1030 = vmul.f32 %v1028, %v157
    %1031 = vmatpush.msra.mxu0 0.0
    %1032 = vmatpush.msra.mxu0 0.0
    %1033 = vmatpush.msra.mxu0 0.0
    %1034 = vmatpush.msra.mxu0 0.0
    %1035 = vmatpush.msra.mxu0 0.0
    %1036 = vmatpush.msra.mxu0 0.0
    %1037 = vmatpush.msra.mxu0 0.0
    %1038 = vmatpush.msra.mxu0 %v1029
    %1039 = vmatpush.msra.mxu0 %v1021
    %1040 = vmatpush.msra.mxu0 %v1013
    %1041 = vmatpush.msra.mxu0 %v1005
    %1042 = vmatpush.msra.mxu0 %v965
    %1043 = vmatpush.msra.mxu0 %v997
    %1044 = vmatpush.msra.mxu0 %v989
    %1045 = vmatpush.msra.mxu0 %v981
    %1046 = vmatpush.msra.mxu0 %v973
    %1047 = vmatmul.f32.gmra.mxu0 %v169
    %v1048 = vpop.f32.mrf.mxu0
    %v1049 = vadd.f32 %v165, %v1048
    %1050 = vdwg.mxu0
    %1051 = vmatpush.msra.mxu0 0.0
    %1052 = vmatpush.msra.mxu0 0.0
    %1053 = vmatpush.msra.mxu0 0.0
    %1054 = vmatpush.msra.mxu0 0.0
    %1055 = vmatpush.msra.mxu0 0.0
    %1056 = vmatpush.msra.mxu0 0.0
    %1057 = vmatpush.msra.mxu0 0.0
    %1058 = vmatpush.msra.mxu0 %v1030
    %1059 = vmatpush.msra.mxu0 %v1022
    %1060 = vmatpush.msra.mxu0 %v1014
    %1061 = vmatpush.msra.mxu0 %v1006
    %1062 = vmatpush.msra.mxu0 %v966
    %1063 = vmatpush.msra.mxu0 %v998
    %1064 = vmatpush.msra.mxu0 %v990
    %1065 = vmatpush.msra.mxu0 %v982
    %1066 = vmatpush.msra.mxu0 %v974
    %1067 = vmatmul.f32.gmra.mxu0 %v169
    %v1068 = vpop.f32.mrf.mxu0
    %v1069 = vadd.f32 %v165, %v1068
    %1070 = vdwg.mxu0
    %s1071 = sld [smem:[#allocation2 + $0x15]]
    %s1072 = sld [smem:[#allocation2 + $0x16]]
    %s1073 = sld [smem:[#allocation2 + $0x17]]
    %v1074 = vstv %s1071
    %v1075 = vmul.f32 %v1074, %v965
    %v1076 = vmul.f32 %v1074, %v966
    %v1077 = vstv %s1072
    %v1078 = vmul.f32 %v1077, %v1049
    %v1079 = vmul.f32 %v1077, %v1069
    %v1080 = vadd.f32 %v1075, %v1078
    %v1081 = vadd.f32 %v1076, %v1079
    %s1082 = scalar_lea.vmem %s5, 112
    %v1083 = vld [vmem:[%s1082] sm:$0xff]
    %v1084 = vld [vmem:[%s1082 + $0x8] sm:$0xff]
    %v1085 = vstv %s1073
    %v1086 = vmul.f32 %v1085, %v1083
    %v1087 = vmul.f32 %v1085, %v1084
    %v1088 = vadd.f32 %v1080, %v1086
    %v1089 = vadd.f32 %v1081, %v1087
    %1090 = vst [vmem:[%s6] sm:$0xff] %v1088
    %1091 = vst [vmem:[%s6 + $0x8] sm:$0xff] %v1089
    // Predicated region
    $region30: #{diffusion_sde_forward.1} parent=1 // pred_check
      _
    $region31: #{diffusion_sde_forward.1} parent=1 // pred_check_branch
      %1093 = sbr.rel (0) target = $region33
    $region32: #{diffusion_sde_forward.1} parent=1 // pred_region
      _
    $region33: #{diffusion_sde_forward.1} parent=1 // pred_fallthru
      _
    // Predicated region
    $region34: #{diffusion_sde_forward.1} parent=1 // pred_check
      _
    $region35: #{diffusion_sde_forward.1} parent=1 // pred_check_branch
      %1095 = sbr.rel (0) target = $region37
    $region36: #{diffusion_sde_forward.1} parent=1 // pred_region
      _
    $region37: #{diffusion_sde_forward.1} parent=1 // pred_fallthru
      _
    %1096 = vsyncpa [#allocation3], 1

</llo_original>
